<compile_context>
chip_gen: v7x
topology: tpu7x:2x2x1
jax: 0.10.0
libtpu: 0.0.40
codegen_flags: <defaults>
</compile_context>

<pallas_src>
import functools

import numpy as np
import jax
import jax.numpy as jnp
from jax.experimental import pallas as pl
from jax.experimental.pallas import tpu as pltpu

EPS = 1e-6        # module's self.eps (used inside both log() terms)
NEG_INF = -1e30   # masks pad / ptr vocab lanes out of the softmax (exp underflows to 0)
SLAB = 128        # lane-dense packed slab for the narrow outputs [h_new | enc_attn | p_ptr]


def decoder_rnn_kernel(
    emb_ref, hprev_ref, enc_h_ref, dec_st_ref, cover_ref, idx_ref,
    w_gx_ref, w_gh_ref, b_gru_ref, w_att_ref, w_out_ref, b_out_ref, scal_ref,
    out_ref, slab_ref,
):
    f32 = jnp.float32
    H = w_gh_ref.shape[0]
    He = enc_h_ref.shape[2]
    B = emb_ref.shape[0]
    Vp = out_ref.shape[1]

    x = emb_ref[...]                 # (B, E)
    h = hprev_ref[...]               # (B, H)

    # ---- single-step GRU: two row-block matmuls into one lane-dense (B, 4H=128) gate tile ----
    # column blocks [r | z | n_x | n_h]; r/z biases pre-summed at pack time.
    g = (jnp.dot(x, w_gx_ref[...], preferred_element_type=f32)
         + jnp.dot(h, w_gh_ref[...], preferred_element_type=f32)
         + b_gru_ref[...])                                                        # (B, 4H)
    r = jax.nn.sigmoid(g[:, 0:H])
    z = jax.nn.sigmoid(g[:, H:2 * H])
    n = jnp.tanh(g[:, 2 * H:3 * H] + r * g[:, 3 * H:4 * H])
    h_new = (1.0 - z) * n + z * h                                                 # (B, H)

    # scalars live in SMEM: [b_enc, cover_w, b_dec]  (b_ptr is folded into b_out)
    b_enc = scal_ref[0]
    cover_w = scal_ref[1]
    b_dec = scal_ref[2]

    # ---- fused attention projections: ONE matmul, static lane split ----
    hw = jnp.dot(h_new, w_att_ref[...], preferred_element_type=f32)               # (B, He+H)
    hw_e = hw[:, :He]
    hw_d = hw[:, He:]

    # ---- encoder attention (+ coverage): tiny contraction dims -> VPU mult + reduce ----
    enc_h = enc_h_ref[...]                                                        # (B, Se, He)
    scores_e = jnp.sum(hw_e[:, None, :] * enc_h, axis=-1) + b_enc                 # (B, Se)
    scores_e = scores_e + cover_w * jnp.log(cover_ref[...] + EPS)
    m_e = jnp.max(scores_e, axis=1, keepdims=True)
    e_e = jnp.exp(scores_e - m_e)
    attn_e = e_e * pl.reciprocal(jnp.sum(e_e, axis=1, keepdims=True), approx=True)
    enc_ctx = jnp.sum(attn_e[:, :, None] * enc_h, axis=1)                         # (B, He)

    # ---- decoder (intra-temporal) attention ----
    dec_st = dec_st_ref[...]                                                      # (B, Sd, H)
    scores_d = jnp.sum(hw_d[:, None, :] * dec_st, axis=-1) + b_dec                # (B, Sd)
    m_d = jnp.max(scores_d, axis=1, keepdims=True)
    e_d = jnp.exp(scores_d - m_d)
    attn_d = e_d * pl.reciprocal(jnp.sum(e_d, axis=1, keepdims=True), approx=True)
    dec_ctx = jnp.sum(attn_d[:, :, None] * dec_st, axis=1)                        # (B, H)

    # ---- output head: 3 row-block matmuls (no `combined` concat); ptr head rides the same
    #      matmuls in the last pad column of w_out. Vocab dim is lane-dense (padded to 128). ----
    logits_full = (jnp.dot(h_new, w_out_ref[0:H, :], preferred_element_type=f32)
                   + jnp.dot(enc_ctx, w_out_ref[H:H + He, :], preferred_element_type=f32)
                   + jnp.dot(dec_ctx, w_out_ref[H + He:, :], preferred_element_type=f32)
                   + b_out_ref[...])                                              # (B, Vp)

    ptr_logit = logits_full[:, Vp - 1:Vp]                                         # (B, 1)
    prob_ptr = jax.nn.sigmoid(ptr_logit)

    # mask the ptr lane out of the softmax; real pad lanes already carry a -1e30 bias.
    col = jax.lax.broadcasted_iota(jnp.int32, (B, Vp), 1)
    logits = jnp.where(col == Vp - 1, NEG_INF, logits_full)

    m_l = jnp.max(logits, axis=1, keepdims=True)
    e_l = jnp.exp(logits - m_l)           # pad/ptr lanes underflow to exactly 0 in f32
    # exact reciprocal here: this softmax feeds log(), approx error would be amplified.
    gen = e_l / jnp.sum(e_l, axis=1, keepdims=True)                               # (B, Vp)
    acc = (1.0 - prob_ptr) * gen          # generator part; exactly 0 in pad lanes

    # ---- scatter_add_(1, encoder_word_idx, prob_ptr * enc_attn) ----
    # one-hot build + MXU contraction (duplicate indices accumulate, matching torch).
    # NOTE: indices >= ext_vocab_size would silently land in pad lanes and be sliced off
    #       by the wrapper (PyTorch would raise); upstream guarantees idx < ext_vocab_size.
    idx = idx_ref[...]                                                            # (B, Se) int32
    Se = idx.shape[1]
    val = prob_ptr * attn_e                                                       # (B, Se)
    col3 = jax.lax.broadcasted_iota(jnp.int32, (B, Se, Vp), 2)
    onehot = (idx[:, :, None] == col3).astype(f32)                                # (B, Se, Vp)
    acc = acc + jnp.einsum('bqs,bsv->bqv', val[:, None, :], onehot,
                           preferred_element_type=f32)[:, 0, :]

    out_ref[...] = jnp.log(acc + EPS)

    # ---- narrow outputs packed into one lane-dense slab: [h_new | enc_attn | prob_ptr | 0] ----
    pad = slab_ref.shape[1] - (H + Se + 1)
    slab_ref[...] = jnp.concatenate(
        [h_new, attn_e, prob_ptr, jnp.zeros((B, pad), f32)], axis=1)


def pack_params(params, ext_vocab_size):
    """One-time (NOT per-step) packing of the module weights into kernel-friendly layouts."""
    f32 = jnp.float32
    E, H = params["w_i"].shape[1], params["w_i"].shape[2]
    C, V = params["w_out"].shape
    # lane-dense extended vocab; +1 reserves a pad lane for the folded ptr head.
    Vp = ((ext_vocab_size + 1 + 127) // 128) * 128
    assert Vp > ext_vocab_size and Vp > V

    # fused GRU weights, columns [r | z | n_x | n_h]; r/z biases pre-summed.
    w_gru_x = jnp.concatenate([params["w_i"][0], params["w_i"][1], params["w_i"][2],
                               jnp.zeros((E, H), f32)], axis=1)                   # (E, 4H)
    w_gru_h = jnp.concatenate([params["w_h"][0], params["w_h"][1],
                               jnp.zeros((H, H), f32), params["w_h"][2]], axis=1)  # (H, 4H)
    b_gru = jnp.concatenate([params["b_i"][0] + params["b_h"][0],
                             params["b_i"][1] + params["b_h"][1],
                             params["b_i"][2], params["b_h"][2]], axis=1)         # (1, 4H)

    # fused attention projections [w_enc | w_dec].
    w_att = jnp.concatenate([params["w_enc"], params["w_dec"]], axis=1)           # (H, He+H)

    # output head padded to Vp lanes; pad bias -1e30 so the softmax ignores those lanes;
    # the ptr linear (w_ptr, b_ptr) is folded into the LAST pad column.
    # TODO(synk): store this in bf16 (fp8 on v7x) and stream it in vocab tiles at real V.
    w_out_p = jnp.concatenate([params["w_out"],
                               jnp.zeros((C, Vp - 1 - V), f32),
                               params["w_ptr"].reshape(C, 1)], axis=1)            # (C, Vp)
    b_out_p = jnp.concatenate([params["b_out"],
                               jnp.full((1, Vp - 1 - V), NEG_INF, f32),
                               params["b_ptr"].reshape(1, 1)], axis=1)            # (1, Vp)

    # (1,1) scalars packed into one SMEM vector: [b_enc, cover_w, b_dec]
    scalars = jnp.concatenate([params["b_enc"].reshape(1), params["cover_w"].reshape(1),
                               params["b_dec"].reshape(1)]).astype(f32)           # (3,)

    return dict(w_gru_x=w_gru_x, w_gru_h=w_gru_h, b_gru=b_gru, w_att=w_att,
                w_out_p=w_out_p, b_out_p=b_out_p, scalars=scalars)


@functools.partial(jax.jit, static_argnames=("ext_vocab_size",))
def decoder_step(packed, embedded, hidden, enc_h_bm, dec_st_bm, coverage_vector,
                 encoder_word_idx, *, ext_vocab_size):
    """Per-token decode step. `packed` comes from pack_params (built once);
    enc_h_bm / dec_st_bm are batch-major (transposed once after encoding)."""
    f32 = jnp.float32
    B, E = embedded.shape
    H = hidden.shape[-1]
    Se, He = enc_h_bm.shape[1], enc_h_bm.shape[2]
    Sd = dec_st_bm.shape[1]
    C, Vp = packed["w_out_p"].shape
    assert H + Se + 1 <= SLAB  # TODO(synk): split the packed small-output slab if H/Se grow

    args = (
        embedded.astype(f32), hidden[0].astype(f32),
        enc_h_bm.astype(f32), dec_st_bm.astype(f32),
        coverage_vector.astype(f32), encoder_word_idx.astype(jnp.int32),
        packed["w_gru_x"], packed["w_gru_h"], packed["b_gru"], packed["w_att"],
        packed["w_out_p"], packed["b_out_p"], packed["scalars"],
    )
    vmem = pl.BlockSpec(memory_space=pltpu.MemorySpace.VMEM)
    smem = pl.BlockSpec(memory_space=pltpu.MemorySpace.SMEM)
    in_specs = [vmem] * (len(args) - 1) + [smem]

    out_shapes = (
        jax.ShapeDtypeStruct((B, Vp), f32),     # log-probs over the padded extended vocab
        jax.ShapeDtypeStruct((B, SLAB), f32),   # [h_new | enc_attn | prob_ptr | 0] slab
    )

    flops = int(2 * B * (E + H) * 4 * H            # GRU row-block matmuls
                + 2 * B * H * (He + H)             # attention projections
                + 4 * B * Se * He + 4 * B * Sd * H  # attn scores + contexts
                + 2 * B * C * Vp                   # output head
                + 2 * B * Se * Vp)                 # pointer scatter contraction
    transcendentals = int(B * (3 * H + Vp + 2 * Se + Sd + 1))
    bytes_accessed = int(4 * (sum(a.size for a in args) + B * Vp + B * SLAB))

    out_full, slab = pl.pallas_call(
        decoder_rnn_kernel,
        out_shape=out_shapes,
        in_specs=in_specs,
        out_specs=(vmem, vmem),
        compiler_params=pltpu.CompilerParams(vmem_limit_bytes=32 * 1024 * 1024),
        cost_estimate=pl.CostEstimate(flops=flops, transcendentals=transcendentals,
                                      bytes_accessed=bytes_accessed),
    )(*args)

    h_new = slab[:, :H]
    enc_attn = slab[:, H:H + Se]
    prob_ptr = slab[:, H + Se:H + Se + 1]
    # PyTorch conventions: hidden keeps the num_layers dim; output sliced to ext vocab.
    return out_full[:, :ext_vocab_size], h_new[None], enc_attn, prob_ptr


def init_params(key, vocab_size, embed_size, hidden_size, enc_hidden_size):
    C = hidden_size + enc_hidden_size + hidden_size  # combined_size
    ks = jax.random.split(key, 12)
    s = 0.1

    def u(k, shape, lo=-s, hi=s):
        return jax.random.uniform(k, shape, jnp.float32, lo, hi)

    return dict(
        w_i=u(ks[0], (3, embed_size, hidden_size)),     # GRU input weights (r, z, n), pre-transposed
        w_h=u(ks[1], (3, hidden_size, hidden_size)),    # GRU hidden weights (r, z, n)
        b_i=u(ks[2], (3, 1, hidden_size)),
        b_h=u(ks[3], (3, 1, hidden_size)),
        w_enc=u(ks[4], (hidden_size, enc_hidden_size)), # enc_bilinear weight (out_features=1)
        b_enc=u(ks[5], (1, 1)),
        cover_w=jax.random.uniform(ks[6], (1, 1), jnp.float32, 0.0, 1.0),
        w_dec=u(ks[7], (hidden_size, hidden_size)),     # dec_bilinear weight
        b_dec=u(ks[8], (1, 1)),
        w_out=u(ks[9], (C, vocab_size)),                # out linear, pre-transposed
        b_out=u(ks[10], (1, vocab_size)),
        w_ptr=u(ks[11], (1, C)),                        # ptr linear (row vector)
        b_ptr=jnp.zeros((1, 1), jnp.float32),
    )


def reference_forward(params, embedded, hidden, encoder_hidden, decoder_states,
                      coverage_vector, encoder_word_idx, ext_vocab_size):
    p = {k: np.asarray(v, np.float64) for k, v in params.items()}
    x = np.asarray(embedded, np.float64)
    h = np.asarray(hidden, np.float64)[0]
    enc_h = np.transpose(np.asarray(encoder_hidden, np.float64), (1, 0, 2))
    dec_st = np.transpose(np.asarray(decoder_states, np.float64), (1, 0, 2))
    cover = np.asarray(coverage_vector, np.float64)
    idx = np.asarray(encoder_word_idx)

    def sigmoid(v):
        return 1.0 / (1.0 + np.exp(-v))

    def softmax(v, axis):
        e = np.exp(v - v.max(axis=axis, keepdims=True))
        return e / e.sum(axis=axis, keepdims=True)

    gi = [x @ p["w_i"][g] + p["b_i"][g] for g in range(3)]
    gh = [h @ p["w_h"][g] + p["b_h"][g] for g in range(3)]
    r = sigmoid(gi[0] + gh[0])
    z = sigmoid(gi[1] + gh[1])
    n = np.tanh(gi[2] + r * gh[2])
    h_new = (1 - z) * n + z * h

    scores_e = np.einsum("bj,bsj->bs", h_new @ p["w_enc"], enc_h) + p["b_enc"][0, 0]
    scores_e += p["cover_w"][0, 0] * np.log(cover + EPS)
    attn_e = softmax(scores_e, 1)
    enc_ctx = np.einsum("bs,bsj->bj", attn_e, enc_h)

    scores_d = np.einsum("bj,bsj->bs", h_new @ p["w_dec"], dec_st) + p["b_dec"][0, 0]
    attn_d = softmax(scores_d, 1)
    dec_ctx = np.einsum("bs,bsj->bj", attn_d, dec_st)

    combined = np.concatenate([h_new, enc_ctx, dec_ctx], axis=1)
    logits = combined @ p["w_out"] + p["b_out"]
    prob_ptr = sigmoid(np.sum(combined * p["w_ptr"], axis=1, keepdims=True) + p["b_ptr"][0, 0])
    gen = (1 - prob_ptr) * softmax(logits, 1)

    B, V = gen.shape
    out = np.zeros((B, ext_vocab_size), np.float64)
    out[:, :V] = gen
    np.add.at(out, (np.arange(B)[:, None], idx), prob_ptr * attn_e)
    out = np.log(out + EPS)
    return out, h_new[None], attn_e, prob_ptr


if __name__ == "__main__":
    B, E, H = 2, 16, 32
    He = H                     # enc_hidden_size defaults to hidden_size
    Se, Sd = 8, 4              # encoder / previous-decoder steps
    V, Vext = 50, 64           # vocab / extended vocab

    key = jax.random.PRNGKey(0)
    kp, k1, k2, k3, k4, k5, k6 = jax.random.split(key, 7)
    params = init_params(kp, V, E, H, He)

    embedded = jax.random.normal(k1, (B, E), jnp.float32)
    hidden = jax.random.normal(k2, (1, B, H), jnp.float32)
    encoder_hidden = jax.random.normal(k3, (Se, B, He), jnp.float32)   # time-major, torch layout
    decoder_states = jax.random.normal(k4, (Sd, B, H), jnp.float32)
    coverage = jax.random.uniform(k5, (B, Se), jnp.float32, 0.05, 1.0)
    enc_word_idx = jax.random.randint(k6, (B, Se), 0, Vext, jnp.int32)

    # One-time prep (outside the per-step path): weight packing + batch-major transposes.
    packed = pack_params(params, ext_vocab_size=Vext)
    enc_h_bm = jnp.transpose(encoder_hidden, (1, 0, 2))
    dec_st_bm = jnp.transpose(decoder_states, (1, 0, 2))

    out, h_new, enc_attn, prob_ptr = jax.block_until_ready(
        decoder_step(packed, embedded, hidden, enc_h_bm, dec_st_bm, coverage,
                     enc_word_idx, ext_vocab_size=Vext))

    ref_out, ref_h, ref_attn, ref_pptr = reference_forward(
        params, embedded, hidden, encoder_hidden, decoder_states,
        coverage, enc_word_idx, Vext)

    np.testing.assert_allclose(np.asarray(out), ref_out, rtol=2e-3, atol=2e-3)
    np.testing.assert_allclose(np.asarray(h_new), ref_h, rtol=2e-3, atol=2e-3)
    np.testing.assert_allclose(np.asarray(enc_attn), ref_attn, rtol=2e-3, atol=2e-3)
    np.testing.assert_allclose(np.asarray(prob_ptr), ref_pptr, rtol=2e-3, atol=2e-3)

    print("KERNEL_OK")
</pallas_src>

<mosaic_0001>
module attributes {stable_mosaic.version = 11 : i64} {
  func.func @decoder_rnn_kernel(%arg0: memref<2x16xf32, #tpu.memory_space<vmem>>, %arg1: memref<2x32xf32, #tpu.memory_space<vmem>>, %arg2: memref<2x8x32xf32, #tpu.memory_space<vmem>>, %arg3: memref<2x4x32xf32, #tpu.memory_space<vmem>>, %arg4: memref<2x8xf32, #tpu.memory_space<vmem>>, %arg5: memref<2x8xi32, #tpu.memory_space<vmem>>, %arg6: memref<16x128xf32, #tpu.memory_space<vmem>>, %arg7: memref<32x128xf32, #tpu.memory_space<vmem>>, %arg8: memref<1x128xf32, #tpu.memory_space<vmem>>, %arg9: memref<32x64xf32, #tpu.memory_space<vmem>>, %arg10: memref<96x128xf32, #tpu.memory_space<vmem>>, %arg11: memref<1x128xf32, #tpu.memory_space<vmem>>, %arg12: memref<3xf32, #tpu.memory_space<smem>>, %arg13: memref<2x128xf32, #tpu.memory_space<vmem>>, %arg14: memref<2x128xf32, #tpu.memory_space<vmem>>) attributes {dimension_semantics = [], scalar_prefetch = 0 : i64, scratch_operands = 0 : i64, tpu.core_type = #tpu.core_type<tc>} {
    %c0 = arith.constant 0 : index
    %c0_0 = arith.constant 0 : index
    %0 = vector.load %arg0[%c0, %c0_0] : memref<2x16xf32, #tpu.memory_space<vmem>>, vector<2x16xf32>
    %c0_1 = arith.constant 0 : index
    %c0_2 = arith.constant 0 : index
    %1 = vector.load %arg1[%c0_1, %c0_2] : memref<2x32xf32, #tpu.memory_space<vmem>>, vector<2x32xf32>
    %c0_3 = arith.constant 0 : index
    %c0_4 = arith.constant 0 : index
    %2 = vector.load %arg6[%c0_3, %c0_4] : memref<16x128xf32, #tpu.memory_space<vmem>>, vector<16x128xf32>
    %cst = arith.constant dense<0.000000e+00> : vector<2x128xf32>
    %3 = tpu.matmul %0, %2, %cst {dimension_numbers = #tpu.dot_dimension_numbers<[1], [0], [0], [1], [0, 0, 1, 1], [], []>} : vector<2x16xf32>, vector<16x128xf32>, vector<2x128xf32> -> vector<2x128xf32>
    %c0_5 = arith.constant 0 : index
    %c0_6 = arith.constant 0 : index
    %4 = vector.load %arg7[%c0_5, %c0_6] : memref<32x128xf32, #tpu.memory_space<vmem>>, vector<32x128xf32>
    %cst_7 = arith.constant dense<0.000000e+00> : vector<2x128xf32>
    %5 = tpu.matmul %1, %4, %cst_7 {dimension_numbers = #tpu.dot_dimension_numbers<[1], [0], [0], [1], [0, 0, 1, 1], [], []>} : vector<2x32xf32>, vector<32x128xf32>, vector<2x128xf32> -> vector<2x128xf32>
    %6 = arith.addf %3, %5 : vector<2x128xf32>
    %c0_8 = arith.constant 0 : index
    %c0_9 = arith.constant 0 : index
    %7 = vector.load %arg8[%c0_8, %c0_9] : memref<1x128xf32, #tpu.memory_space<vmem>>, vector<1x128xf32>
    %8 = vector.broadcast %7 : vector<1x128xf32> to vector<2x128xf32>
    %9 = arith.addf %6, %8 : vector<2x128xf32>
    %10 = vector.extract_strided_slice %9 {offsets = [0, 0], sizes = [2, 32], strides = [1, 1]} : vector<2x128xf32> to vector<2x32xf32>
    %11 = arith.negf %10 : vector<2x32xf32>
    %12 = math.exp %11 : vector<2x32xf32>
    %cst_10 = arith.constant 1.000000e+00 : f32
    %13 = vector.broadcast %cst_10 : f32 to vector<2x32xf32>
    %14 = arith.addf %13, %12 : vector<2x32xf32>
    %15 = arith.divf %13, %14 : vector<2x32xf32>
    %16 = vector.extract_strided_slice %9 {offsets = [0, 32], sizes = [2, 32], strides = [1, 1]} : vector<2x128xf32> to vector<2x32xf32>
    %17 = arith.negf %16 : vector<2x32xf32>
    %18 = math.exp %17 : vector<2x32xf32>
    %cst_11 = arith.constant 1.000000e+00 : f32
    %19 = vector.broadcast %cst_11 : f32 to vector<2x32xf32>
    %20 = arith.addf %19, %18 : vector<2x32xf32>
    %21 = arith.divf %19, %20 : vector<2x32xf32>
    %22 = vector.extract_strided_slice %9 {offsets = [0, 64], sizes = [2, 32], strides = [1, 1]} : vector<2x128xf32> to vector<2x32xf32>
    %23 = vector.extract_strided_slice %9 {offsets = [0, 96], sizes = [2, 32], strides = [1, 1]} : vector<2x128xf32> to vector<2x32xf32>
    %24 = arith.mulf %15, %23 : vector<2x32xf32>
    %25 = arith.addf %22, %24 : vector<2x32xf32>
    %26 = math.tanh %25 : vector<2x32xf32>
    %cst_12 = arith.constant 1.000000e+00 : f32
    %27 = vector.broadcast %cst_12 : f32 to vector<2x32xf32>
    %28 = arith.subf %27, %21 : vector<2x32xf32>
    %29 = arith.mulf %28, %26 : vector<2x32xf32>
    %30 = arith.mulf %21, %1 : vector<2x32xf32>
    %31 = arith.addf %29, %30 : vector<2x32xf32>
    %c0_13 = arith.constant 0 : index
    %32 = memref.load %arg12[%c0_13] : memref<3xf32, #tpu.memory_space<smem>>
    %c1 = arith.constant 1 : index
    %33 = memref.load %arg12[%c1] : memref<3xf32, #tpu.memory_space<smem>>
    %c2 = arith.constant 2 : index
    %34 = memref.load %arg12[%c2] : memref<3xf32, #tpu.memory_space<smem>>
    %c0_14 = arith.constant 0 : index
    %c0_15 = arith.constant 0 : index
    %35 = vector.load %arg9[%c0_14, %c0_15] : memref<32x64xf32, #tpu.memory_space<vmem>>, vector<32x64xf32>
    %cst_16 = arith.constant dense<0.000000e+00> : vector<2x64xf32>
    %36 = tpu.matmul %31, %35, %cst_16 {dimension_numbers = #tpu.dot_dimension_numbers<[1], [0], [0], [1], [0, 0, 1, 1], [], []>} : vector<2x32xf32>, vector<32x64xf32>, vector<2x64xf32> -> vector<2x64xf32>
    %37 = vector.extract_strided_slice %36 {offsets = [0, 0], sizes = [2, 32], strides = [1, 1]} : vector<2x64xf32> to vector<2x32xf32>
    %38 = vector.extract_strided_slice %36 {offsets = [0, 32], sizes = [2, 32], strides = [1, 1]} : vector<2x64xf32> to vector<2x32xf32>
    %c0_17 = arith.constant 0 : index
    %c0_18 = arith.constant 0 : index
    %c0_19 = arith.constant 0 : index
    %39 = vector.load %arg2[%c0_17, %c0_18, %c0_19] : memref<2x8x32xf32, #tpu.memory_space<vmem>>, vector<2x8x32xf32>
    %40 = vector.shape_cast %37 : vector<2x32xf32> to vector<2x1x32xf32>
    %41 = vector.broadcast %40 : vector<2x1x32xf32> to vector<2x8x32xf32>
    %42 = arith.mulf %41, %39 : vector<2x8x32xf32>
    %cst_20 = arith.constant dense<0.000000e+00> : vector<2x8xf32>
    %43 = vector.multi_reduction <add>, %42, %cst_20 [2] : vector<2x8x32xf32> to vector<2x8xf32>
    %44 = vector.broadcast %32 : f32 to vector<2x8xf32>
    %45 = arith.addf %43, %44 : vector<2x8xf32>
    %c0_21 = arith.constant 0 : index
    %c0_22 = arith.constant 0 : index
    %46 = vector.load %arg4[%c0_21, %c0_22] : memref<2x8xf32, #tpu.memory_space<vmem>>, vector<2x8xf32>
    %cst_23 = arith.constant 9.99999997E-7 : f32
    %47 = vector.broadcast %cst_23 : f32 to vector<2x8xf32>
    %48 = arith.addf %46, %47 : vector<2x8xf32>
    %49 = math.log %48 : vector<2x8xf32>
    %50 = vector.broadcast %33 : f32 to vector<2x8xf32>
    %51 = arith.mulf %50, %49 : vector<2x8xf32>
    %52 = arith.addf %45, %51 : vector<2x8xf32>
    %cst_24 = arith.constant dense<0xFF800000> : vector<2xf32>
    %53 = vector.multi_reduction <maximumf>, %52, %cst_24 [1] : vector<2x8xf32> to vector<2xf32>
    %54 = vector.shape_cast %53 : vector<2xf32> to vector<2x1xf32>
    %55 = vector.broadcast %54 : vector<2x1xf32> to vector<2x8xf32>
    %56 = arith.subf %52, %55 : vector<2x8xf32>
    %57 = math.exp %56 : vector<2x8xf32>
    %cst_25 = arith.constant dense<0.000000e+00> : vector<2xf32>
    %58 = vector.multi_reduction <add>, %57, %cst_25 [1] : vector<2x8xf32> to vector<2xf32>
    %59 = vector.shape_cast %58 : vector<2xf32> to vector<2x1xf32>
    %60 = tpu.reciprocal %59 {approx = true} : vector<2x1xf32> -> vector<2x1xf32>
    %61 = vector.broadcast %60 : vector<2x1xf32> to vector<2x8xf32>
    %62 = arith.mulf %57, %61 : vector<2x8xf32>
    %63 = vector.shape_cast %62 : vector<2x8xf32> to vector<2x8x1xf32>
    %64 = vector.broadcast %63 : vector<2x8x1xf32> to vector<2x8x32xf32>
    %65 = arith.mulf %64, %39 : vector<2x8x32xf32>
    %cst_26 = arith.constant dense<0.000000e+00> : vector<2x32xf32>
    %66 = vector.multi_reduction <add>, %65, %cst_26 [1] : vector<2x8x32xf32> to vector<2x32xf32>
    %c0_27 = arith.constant 0 : index
    %c0_28 = arith.constant 0 : index
    %c0_29 = arith.constant 0 : index
    %67 = vector.load %arg3[%c0_27, %c0_28, %c0_29] : memref<2x4x32xf32, #tpu.memory_space<vmem>>, vector<2x4x32xf32>
    %68 = vector.shape_cast %38 : vector<2x32xf32> to vector<2x1x32xf32>
    %69 = vector.broadcast %68 : vector<2x1x32xf32> to vector<2x4x32xf32>
    %70 = arith.mulf %69, %67 : vector<2x4x32xf32>
    %cst_30 = arith.constant dense<0.000000e+00> : vector<2x4xf32>
    %71 = vector.multi_reduction <add>, %70, %cst_30 [2] : vector<2x4x32xf32> to vector<2x4xf32>
    %72 = vector.broadcast %34 : f32 to vector<2x4xf32>
    %73 = arith.addf %71, %72 : vector<2x4xf32>
    %cst_31 = arith.constant dense<0xFF800000> : vector<2xf32>
    %74 = vector.multi_reduction <maximumf>, %73, %cst_31 [1] : vector<2x4xf32> to vector<2xf32>
    %75 = vector.shape_cast %74 : vector<2xf32> to vector<2x1xf32>
    %76 = vector.broadcast %75 : vector<2x1xf32> to vector<2x4xf32>
    %77 = arith.subf %73, %76 : vector<2x4xf32>
    %78 = math.exp %77 : vector<2x4xf32>
    %cst_32 = arith.constant dense<0.000000e+00> : vector<2xf32>
    %79 = vector.multi_reduction <add>, %78, %cst_32 [1] : vector<2x4xf32> to vector<2xf32>
    %80 = vector.shape_cast %79 : vector<2xf32> to vector<2x1xf32>
    %81 = tpu.reciprocal %80 {approx = true} : vector<2x1xf32> -> vector<2x1xf32>
    %82 = vector.broadcast %81 : vector<2x1xf32> to vector<2x4xf32>
    %83 = arith.mulf %78, %82 : vector<2x4xf32>
    %84 = vector.shape_cast %83 : vector<2x4xf32> to vector<2x4x1xf32>
    %85 = vector.broadcast %84 : vector<2x4x1xf32> to vector<2x4x32xf32>
    %86 = arith.mulf %85, %67 : vector<2x4x32xf32>
    %cst_33 = arith.constant dense<0.000000e+00> : vector<2x32xf32>
    %87 = vector.multi_reduction <add>, %86, %cst_33 [1] : vector<2x4x32xf32> to vector<2x32xf32>
    %c0_34 = arith.constant 0 : index
    %c0_35 = arith.constant 0 : index
    %88 = vector.load %arg10[%c0_34, %c0_35] : memref<96x128xf32, #tpu.memory_space<vmem>>, vector<32x128xf32>
    %cst_36 = arith.constant dense<0.000000e+00> : vector<2x128xf32>
    %89 = tpu.matmul %31, %88, %cst_36 {dimension_numbers = #tpu.dot_dimension_numbers<[1], [0], [0], [1], [0, 0, 1, 1], [], []>} : vector<2x32xf32>, vector<32x128xf32>, vector<2x128xf32> -> vector<2x128xf32>
    %c32 = arith.constant 32 : index
    %c0_37 = arith.constant 0 : index
    %90 = vector.load %arg10[%c32, %c0_37] : memref<96x128xf32, #tpu.memory_space<vmem>>, vector<32x128xf32>
    %cst_38 = arith.constant dense<0.000000e+00> : vector<2x128xf32>
    %91 = tpu.matmul %66, %90, %cst_38 {dimension_numbers = #tpu.dot_dimension_numbers<[1], [0], [0], [1], [0, 0, 1, 1], [], []>} : vector<2x32xf32>, vector<32x128xf32>, vector<2x128xf32> -> vector<2x128xf32>
    %92 = arith.addf %89, %91 : vector<2x128xf32>
    %c64 = arith.constant 64 : index
    %c0_39 = arith.constant 0 : index
    %93 = vector.load %arg10[%c64, %c0_39] : memref<96x128xf32, #tpu.memory_space<vmem>>, vector<32x128xf32>
    %cst_40 = arith.constant dense<0.000000e+00> : vector<2x128xf32>
    %94 = tpu.matmul %87, %93, %cst_40 {dimension_numbers = #tpu.dot_dimension_numbers<[1], [0], [0], [1], [0, 0, 1, 1], [], []>} : vector<2x32xf32>, vector<32x128xf32>, vector<2x128xf32> -> vector<2x128xf32>
    %95 = arith.addf %92, %94 : vector<2x128xf32>
    %c0_41 = arith.constant 0 : index
    %c0_42 = arith.constant 0 : index
    %96 = vector.load %arg11[%c0_41, %c0_42] : memref<1x128xf32, #tpu.memory_space<vmem>>, vector<1x128xf32>
    %97 = vector.broadcast %96 : vector<1x128xf32> to vector<2x128xf32>
    %98 = arith.addf %95, %97 : vector<2x128xf32>
    %99 = vector.extract_strided_slice %98 {offsets = [0, 127], sizes = [2, 1], strides = [1, 1]} : vector<2x128xf32> to vector<2x1xf32>
    %100 = arith.negf %99 : vector<2x1xf32>
    %101 = math.exp %100 : vector<2x1xf32>
    %cst_43 = arith.constant 1.000000e+00 : f32
    %102 = vector.broadcast %cst_43 : f32 to vector<2x1xf32>
    %103 = arith.addf %102, %101 : vector<2x1xf32>
    %104 = arith.divf %102, %103 : vector<2x1xf32>
    %105 = tpu.iota {dimensions = array<i32: 1>} : vector<2x128xi32>
    %c127_i32 = arith.constant 127 : i32
    %106 = vector.broadcast %c127_i32 : i32 to vector<2x128xi32>
    %107 = arith.cmpi eq, %105, %106 : vector<2x128xi32>
    %cst_44 = arith.constant -1.000000e+30 : f32
    %108 = vector.broadcast %cst_44 : f32 to vector<2x128xf32>
    %109 = arith.select %107, %108, %98 : vector<2x128xi1>, vector<2x128xf32>
    %cst_45 = arith.constant dense<0xFF800000> : vector<2xf32>
    %110 = vector.multi_reduction <maximumf>, %109, %cst_45 [1] : vector<2x128xf32> to vector<2xf32>
    %111 = vector.shape_cast %110 : vector<2xf32> to vector<2x1xf32>
    %112 = vector.broadcast %111 : vector<2x1xf32> to vector<2x128xf32>
    %113 = arith.subf %109, %112 : vector<2x128xf32>
    %114 = math.exp %113 : vector<2x128xf32>
    %cst_46 = arith.constant dense<0.000000e+00> : vector<2xf32>
    %115 = vector.multi_reduction <add>, %114, %cst_46 [1] : vector<2x128xf32> to vector<2xf32>
    %116 = vector.shape_cast %115 : vector<2xf32> to vector<2x1xf32>
    %117 = vector.broadcast %116 : vector<2x1xf32> to vector<2x128xf32>
    %118 = arith.divf %114, %117 : vector<2x128xf32>
    %cst_47 = arith.constant 1.000000e+00 : f32
    %119 = vector.broadcast %cst_47 : f32 to vector<2x1xf32>
    %120 = arith.subf %119, %104 : vector<2x1xf32>
    %121 = vector.broadcast %120 : vector<2x1xf32> to vector<2x128xf32>
    %122 = arith.mulf %121, %118 : vector<2x128xf32>
    %c0_48 = arith.constant 0 : index
    %c0_49 = arith.constant 0 : index
    %123 = vector.load %arg5[%c0_48, %c0_49] : memref<2x8xi32, #tpu.memory_space<vmem>>, vector<2x8xi32>
    %124 = vector.broadcast %104 : vector<2x1xf32> to vector<2x8xf32>
    %125 = arith.mulf %124, %62 : vector<2x8xf32>
    %126 = tpu.iota {dimensions = array<i32: 2>} : vector<2x8x128xi32>
    %127 = vector.shape_cast %123 : vector<2x8xi32> to vector<2x8x1xi32>
    %128 = vector.broadcast %127 : vector<2x8x1xi32> to vector<2x8x128xi32>
    %129 = arith.cmpi eq, %128, %126 : vector<2x8x128xi32>
    %130 = arith.extui %129 : vector<2x8x128xi1> to vector<2x8x128xi32>
    %131 = arith.sitofp %130 : vector<2x8x128xi32> to vector<2x8x128xf32>
    %132 = vector.shape_cast %125 : vector<2x8xf32> to vector<2x1x8xf32>
    "tpu.trace_start"() <{level = 10 : i32, message = "bqs,bsv->bqv"}> : () -> ()
    %cst_50 = arith.constant dense<0.000000e+00> : vector<2x1x128xf32>
    %133 = tpu.matmul %132, %131, %cst_50 {dimension_numbers = #tpu.dot_dimension_numbers<[2], [1], [1], [2], [0, 0, 0, 1, 1, 2], [0], [0]>} : vector<2x1x8xf32>, vector<2x8x128xf32>, vector<2x1x128xf32> -> vector<2x1x128xf32>
    "tpu.trace_stop"() : () -> ()
    %134 = vector.shape_cast %133 : vector<2x1x128xf32> to vector<2x128xf32>
    %135 = arith.addf %122, %134 : vector<2x128xf32>
    %cst_51 = arith.constant 9.99999997E-7 : f32
    %136 = vector.broadcast %cst_51 : f32 to vector<2x128xf32>
    %137 = arith.addf %135, %136 : vector<2x128xf32>
    %138 = math.log %137 : vector<2x128xf32>
    %c0_52 = arith.constant 0 : index
    %c0_53 = arith.constant 0 : index
    %139 = vector.load %arg13[%c0_52, %c0_53] : memref<2x128xf32, #tpu.memory_space<vmem>>, vector<2x128xf32>
    tpu.vector_store %arg13[%c0_52, %c0_53], %138 {strides = array<i32>} : memref<2x128xf32, #tpu.memory_space<vmem>>, vector<2x128xf32>,
    %cst_54 = arith.constant 0.000000e+00 : f32
    %140 = vector.broadcast %cst_54 : f32 to vector<2x87xf32>
    %141 = tpu.concatenate %31, %62, %104, %140 in 1 : vector<2x32xf32>, vector<2x8xf32>, vector<2x1xf32>, vector<2x87xf32> -> vector<2x128xf32>
    %c0_55 = arith.constant 0 : index
    %c0_56 = arith.constant 0 : index
    %142 = vector.load %arg14[%c0_55, %c0_56] : memref<2x128xf32, #tpu.memory_space<vmem>>, vector<2x128xf32>
    tpu.vector_store %arg14[%c0_55, %c0_56], %141 {strides = array<i32>} : memref<2x128xf32, #tpu.memory_space<vmem>>, vector<2x128xf32>,
    return
  }
}

</mosaic_0001>

<llo_original>
// kernel: decoder_step.1
$region0: #{decoder_step.1}
  #allocation0 [shape = 'u32[]', space=smem, size = 0x4, offset = 0x4, fixed_abs, tag = 'smem constant byte address 0x4 - core index']
  #allocation1 [shape = 'u32[144,128]{1,0:T(1,128)}', space=vmem, size = 0x12000, scoped, tag = 'internal scratch']
  %s0 = inlined_call_operand.vmem [shape: f32[2,16], index: 0, kind: input, shape index: {}]
  %s1 = inlined_call_operand.vmem [shape: f32[2,32], index: 1, kind: input, shape index: {}]
  %s2 = inlined_call_operand.vmem [shape: f32[2,8,32], index: 2, kind: input, shape index: {}]
  %s3 = inlined_call_operand.vmem [shape: f32[2,4,32], index: 3, kind: input, shape index: {}]
  %s4 = inlined_call_operand.vmem [shape: f32[2,8], index: 4, kind: input, shape index: {}]
  %s5 = inlined_call_operand.vmem [shape: s32[2,8], index: 5, kind: input, shape index: {}]
  %s6 = inlined_call_operand.hbm [shape: f32[16,128], index: 6, kind: input, shape index: {}]
  %s7 = inlined_call_operand.hbm [shape: f32[32,128], index: 7, kind: input, shape index: {}]
  %s8 = inlined_call_operand.hbm [shape: f32[1,128], index: 8, kind: input, shape index: {}]
  %s9 = inlined_call_operand.hbm [shape: f32[32,64], index: 9, kind: input, shape index: {}]
  %s10 = inlined_call_operand.hbm [shape: f32[96,128], index: 10, kind: input, shape index: {}]
  %s11 = inlined_call_operand.hbm [shape: f32[1,128], index: 11, kind: input, shape index: {}]
  %s12 = inlined_call_operand.hbm [shape: f32[3], index: 12, kind: input, shape index: {}]
  %s13 = inlined_call_operand.hbm [shape: f32[2,128], index: 13, kind: output, shape index: {0}]
  %s14 = inlined_call_operand.vmem [shape: f32[2,128], index: 14, kind: output, shape index: {1}]
  %15 = xla_tuple %s13, %s14
  %s16 = sld [smem:[#allocation0]]
  $region98: #{decoder_step.1} parent=0
    _
  %s18 = ssub.s32 1, %s16
  %s19 = scalar_select 0, %s18, %s16
  $region1: #{decoder_step.1} parent=0
    #allocation2 [shape = 'u8[8192]{0}', space=vmem, size = 0x2000, scoped, tag = 'input window, operand 6, single buffered']
    #allocation3 [shape = 's32[1]{0}', space=sflag, size = 0x4, scoped, tag = 'scoped memory for decoder_step.1']
    #allocation4 [shape = 's32[1]{0}', space=sflag, size = 0x4, scoped, tag = 'scoped memory for decoder_step.1']
    #allocation5 [shape = 's32[1]{0}', space=sflag, size = 0x4, scoped, tag = 'scoped memory for decoder_step.1']
    #allocation6 [shape = 'u8[16384]{0}', space=vmem, size = 0x4000, scoped, tag = 'input window, operand 7, single buffered']
    #allocation7 [shape = 's32[1]{0}', space=sflag, size = 0x4, scoped, tag = 'scoped memory for decoder_step.1']
    #allocation8 [shape = 'u8[512]{0}', space=vmem, size = 0x400, scoped, tag = 'input window, operand 8, single buffered']
    #allocation9 [shape = 'u8[16384]{0}', space=vmem, size = 0x4000, scoped, tag = 'input window, operand 9, single buffered']
    #allocation10 [shape = 's32[1]{0}', space=sflag, size = 0x4, scoped, tag = 'scoped memory for decoder_step.1']
    #allocation11 [shape = 'u8[49152]{0}', space=vmem, size = 0xc000, scoped, tag = 'input window, operand 10, single buffered']
    #allocation12 [shape = 'u8[512]{0}', space=vmem, size = 0x400, scoped, tag = 'input window, operand 11, single buffered']
    #allocation13 [shape = 's32[1]{0}', space=sflag, size = 0x4, scoped, tag = 'scoped memory for decoder_step.1']
    #allocation14 [shape = 'u8[512]{0}', space=smem, size = 0x200, scoped, tag = 'input window, operand 12, single buffered']
    #allocation15 [shape = 'u8[1024]{0}', space=vmem, size = 0x400, scoped, tag = 'output window, operand 0, single buffered']
    %20 = vsyncpa [#allocation3], 0
    %21 = vsyncpa [#allocation7], 0
    %22 = vsyncpa [#allocation10], 0
    %23 = vsyncpa [#allocation13], 0
    %24 = vsyncpa [#allocation5], 0
    %25 = vsyncpa [#allocation4], 0
    // Predicated region
    $region2: #{decoder_step.1} parent=1 // pred_check
      _
    $region3: #{decoder_step.1} parent=1 // pred_check_branch
      %27 = sbr.rel (0) target = $region5
    $region4: #{decoder_step.1} parent=1 // pred_region
      _
    $region5: #{decoder_step.1} parent=1 // pred_fallthru
      _
    // Predicated region
    $region6: #{decoder_step.1} parent=1 // pred_check
      _
    $region7: #{decoder_step.1} parent=1 // pred_check_branch
      %29 = sbr.rel (0) target = $region9
    $region8: #{decoder_step.1} parent=1 // pred_region
      _
    $region9: #{decoder_step.1} parent=1 // pred_fallthru
      _
    // Predicated region
    $region10: #{decoder_step.1} parent=1 // pred_check
      _
    $region11: #{decoder_step.1} parent=1 // pred_check_branch
      %31 = sbr.rel (0) target = $region13
    $region12: #{decoder_step.1} parent=1 // pred_region
      _
    $region13: #{decoder_step.1} parent=1 // pred_fallthru
      _
    // Predicated region
    $region14: #{decoder_step.1} parent=1 // pred_check
      _
    $region15: #{decoder_step.1} parent=1 // pred_check_branch
      %33 = sbr.rel (0) target = $region17
    $region16: #{decoder_step.1} parent=1 // pred_region
      _
    $region17: #{decoder_step.1} parent=1 // pred_fallthru
      _
    // Predicated region
    $region18: #{decoder_step.1} parent=1 // pred_check
      _
    $region19: #{decoder_step.1} parent=1 // pred_check_branch
      %35 = sbr.rel (0) target = $region21
    $region20: #{decoder_step.1} parent=1 // pred_region
      _
    $region21: #{decoder_step.1} parent=1 // pred_fallthru
      _
    // Predicated region
    $region22: #{decoder_step.1} parent=1 // pred_check
      _
    $region23: #{decoder_step.1} parent=1 // pred_check_branch
      %37 = sbr.rel (0) target = $region25
    $region24: #{decoder_step.1} parent=1 // pred_region
      _
    $region25: #{decoder_step.1} parent=1 // pred_fallthru
      _
    // Predicated region
    $region26: #{decoder_step.1} parent=1 // pred_check
      _
    $region27: #{decoder_step.1} parent=1 // pred_check_branch
      %39 = sbr.rel (0) target = $region29
    $region28: #{decoder_step.1} parent=1 // pred_region
      %s41 = ssub.s32 256, 256
      %42 = vsyncadd [#allocation3], %s41
      %s43 = sshll.u32 [#allocation2], 4
      %s44 = int_to_ptr.vmem [resolvable:$true] %s43
      %49 = dma.hbm_to_vmem [thread:$0]  %s6, 256, %s44, [#allocation3], 128, 128, 8
    $region29: #{decoder_step.1} parent=1 // pred_fallthru
      _
    // Predicated region
    $region30: #{decoder_step.1} parent=1 // pred_check
      _
    $region31: #{decoder_step.1} parent=1 // pred_check_branch
      %51 = sbr.rel (0) target = $region33
    $region32: #{decoder_step.1} parent=1 // pred_region
      %s53 = ssub.s32 512, 512
      %54 = vsyncadd [#allocation7], %s53
      %s55 = sshll.u32 [#allocation6], 4
      %s56 = int_to_ptr.vmem [resolvable:$true] %s55
      %61 = dma.hbm_to_vmem [thread:$0]  %s7, 512, %s56, [#allocation7], 128, 128, 8
    $region33: #{decoder_step.1} parent=1 // pred_fallthru
      _
    // Predicated region
    $region34: #{decoder_step.1} parent=1 // pred_check
      _
    $region35: #{decoder_step.1} parent=1 // pred_check_branch
      %63 = sbr.rel (0) target = $region37
    $region36: #{decoder_step.1} parent=1 // pred_region
      %s65 = ssub.s32 16, 16
      %66 = vsyncadd [#allocation7], %s65
      %s68 = sshll.u32 [#allocation8], 4
      %s69 = int_to_ptr.vmem [resolvable:$true] %s68
      %71 = dma.hbm_to_vmem [thread:$0]  %s8, 16, %s69, [#allocation7]
    $region37: #{decoder_step.1} parent=1 // pred_fallthru
      _
    // Predicated region
    $region38: #{decoder_step.1} parent=1 // pred_check
      _
    $region39: #{decoder_step.1} parent=1 // pred_check_branch
      %73 = sbr.rel (0) target = $region41
    $region40: #{decoder_step.1} parent=1 // pred_region
      %s75 = ssub.s32 512, 512
      %76 = vsyncadd [#allocation10], %s75
      %s77 = sshll.u32 [#allocation9], 4
      %s78 = int_to_ptr.vmem [resolvable:$true] %s77
      %83 = dma.hbm_to_vmem [thread:$0]  %s9, 512, %s78, [#allocation10], 128, 128, 8
    $region41: #{decoder_step.1} parent=1 // pred_fallthru
      _
    // Predicated region
    $region42: #{decoder_step.1} parent=1 // pred_check
      _
    $region43: #{decoder_step.1} parent=1 // pred_check_branch
      %85 = sbr.rel (0) target = $region45
    $region44: #{decoder_step.1} parent=1 // pred_region
      %s87 = ssub.s32 1536, 1536
      %88 = vsyncadd [#allocation10], %s87
      %s89 = sshll.u32 [#allocation11], 4
      %s90 = int_to_ptr.vmem [resolvable:$true] %s89
      %95 = dma.hbm_to_vmem [thread:$0]  %s10, 1536, %s90, [#allocation10], 128, 128, 8
    $region45: #{decoder_step.1} parent=1 // pred_fallthru
      _
    // Predicated region
    $region46: #{decoder_step.1} parent=1 // pred_check
      _
    $region47: #{decoder_step.1} parent=1 // pred_check_branch
      %97 = sbr.rel (0) target = $region49
    $region48: #{decoder_step.1} parent=1 // pred_region
      %s99 = ssub.s32 16, 16
      %100 = vsyncadd [#allocation13], %s99
      %s102 = sshll.u32 [#allocation12], 4
      %s103 = int_to_ptr.vmem [resolvable:$true] %s102
      %105 = dma.hbm_to_vmem [thread:$0]  %s11, 16, %s103, [#allocation13]
    $region49: #{decoder_step.1} parent=1 // pred_fallthru
      _
    // Predicated region
    $region50: #{decoder_step.1} parent=1 // pred_check
      _
    $region51: #{decoder_step.1} parent=1 // pred_check_branch
      %107 = sbr.rel (0) target = $region53
    $region52: #{decoder_step.1} parent=1 // pred_region
      %s109 = ssub.s32 16, 16
      %110 = vsyncadd [#allocation5], %s109
      %113 = dma.hbm_to_smem %s12, 16, [#allocation14], [#allocation5]
    $region53: #{decoder_step.1} parent=1 // pred_fallthru
      _
    // Predicated region
    $region54: #{decoder_step.1} parent=1 // pred_check
      _
    $region55: #{decoder_step.1} parent=1 // pred_check_branch
      %115 = sbr.rel (0) target = $region57
    $region56: #{decoder_step.1} parent=1 // pred_region
      %116 = dma.done [#allocation3], 256
    $region57: #{decoder_step.1} parent=1 // pred_fallthru
      _
    // Predicated region
    $region58: #{decoder_step.1} parent=1 // pred_check
      _
    $region59: #{decoder_step.1} parent=1 // pred_check_branch
      %118 = sbr.rel (0) target = $region61
    $region60: #{decoder_step.1} parent=1 // pred_region
      %119 = dma.done [#allocation7], 512
    $region61: #{decoder_step.1} parent=1 // pred_fallthru
      _
    // Predicated region
    $region62: #{decoder_step.1} parent=1 // pred_check
      _
    $region63: #{decoder_step.1} parent=1 // pred_check_branch
      %121 = sbr.rel (0) target = $region65
    $region64: #{decoder_step.1} parent=1 // pred_region
      %122 = dma.done [#allocation7], 16
    $region65: #{decoder_step.1} parent=1 // pred_fallthru
      _
    // Predicated region
    $region66: #{decoder_step.1} parent=1 // pred_check
      _
    $region67: #{decoder_step.1} parent=1 // pred_check_branch
      %124 = sbr.rel (0) target = $region69
    $region68: #{decoder_step.1} parent=1 // pred_region
      %125 = dma.done [#allocation10], 512
    $region69: #{decoder_step.1} parent=1 // pred_fallthru
      _
    // Predicated region
    $region70: #{decoder_step.1} parent=1 // pred_check
      _
    $region71: #{decoder_step.1} parent=1 // pred_check_branch
      %127 = sbr.rel (0) target = $region73
    $region72: #{decoder_step.1} parent=1 // pred_region
      %128 = dma.done [#allocation10], 1536
    $region73: #{decoder_step.1} parent=1 // pred_fallthru
      _
    // Predicated region
    $region74: #{decoder_step.1} parent=1 // pred_check
      _
    $region75: #{decoder_step.1} parent=1 // pred_check_branch
      %130 = sbr.rel (0) target = $region77
    $region76: #{decoder_step.1} parent=1 // pred_region
      %131 = dma.done [#allocation13], 16
    $region77: #{decoder_step.1} parent=1 // pred_fallthru
      _
    // Predicated region
    $region78: #{decoder_step.1} parent=1 // pred_check
      _
    $region79: #{decoder_step.1} parent=1 // pred_check_branch
      %133 = sbr.rel (0) target = $region81
    $region80: #{decoder_step.1} parent=1 // pred_region
      %134 = dma.done [#allocation5], 16
    $region81: #{decoder_step.1} parent=1 // pred_fallthru
      _
    %135 = sfence
    %v136 = vld [vmem:[%s0] sm:$0x3]
    %v137 = vld [vmem:[%s1] sm:$0x3]
    %v138 = vld [vmem:[#allocation2] sm:$0xff]
    %v139 = vld [vmem:[#allocation2 + $0x8] sm:$0xff]
    %v140 = vld [vmem:[#allocation6] sm:$0xff]
    %v141 = vld [vmem:[#allocation6 + $0x8] sm:$0xff]
    %v142 = vld [vmem:[#allocation6 + $0x10] sm:$0xff]
    %v143 = vld [vmem:[#allocation6 + $0x18] sm:$0xff]
    %vm144 = vcmask 261120
    %v146 = vsel %vm144, %v137, 0
    %148 = vmatprep.subr.mxu0 0.0
    %149 = vmatpush1.msra.mxu0 %v140
    %150 = vmatprep.subr.mxu0 0.0
    %151 = vmatpush1.msra.mxu0 %v141
    %152 = vmatprep.subr.mxu0 0.0
    %153 = vmatpush1.msra.mxu0 %v142
    %154 = vmatprep.subr.mxu0 0.0
    %155 = vmatpush1.msra.mxu0 %v143
    %156 = vmatprep.subr.mxu0 0.0
    %157 = vmatpush1.msra.mxu0 0.0
    %158 = vmatprep.subr.mxu0 0.0
    %159 = vmatpush1.msra.mxu0 0.0
    %160 = vmatprep.subr.mxu0 0.0
    %161 = vmatpush1.msra.mxu0 0.0
    %162 = vmatprep.subr.mxu0 0.0
    %163 = vmatpush1.msra.mxu0 0.0
    %164 = vmatprep.subr.mxu0 0.0
    %165 = vmatpush1.msra.mxu0 0.0
    %166 = vmatprep.subr.mxu0 0.0
    %167 = vmatpush1.msra.mxu0 0.0
    %168 = vmatprep.subr.mxu0 0.0
    %169 = vmatpush1.msra.mxu0 0.0
    %170 = vmatprep.subr.mxu0 0.0
    %171 = vmatpush1.msra.mxu0 0.0
    %172 = vmatprep.subr.mxu0 0.0
    %173 = vmatpush1.msra.mxu0 0.0
    %174 = vmatprep.subr.mxu0 0.0
    %175 = vmatpush1.msra.mxu0 0.0
    %176 = vmatprep.subr.mxu0 0.0
    %177 = vmatpush1.msra.mxu0 0.0
    %178 = vmatprep.subr.mxu0 0.0
    %179 = vmatpush1.msra.mxu0 0.0
    %180 = vmatprep.subr.mxu0 0.0
    %181 = vmatpush1.msra.mxu0 0.0
    %182 = vmatprep.subr.mxu0 0.0
    %183 = vmatpush1.msra.mxu0 0.0
    %184 = vmatprep.subr.mxu0 0.0
    %185 = vmatpush1.msra.mxu0 0.0
    %186 = vmatprep.subr.mxu0 0.0
    %187 = vmatpush1.msra.mxu0 0.0
    %188 = vmatprep.subr.mxu0 0.0
    %189 = vmatpush1.msra.mxu0 0.0
    %190 = vmatprep.subr.mxu0 0.0
    %191 = vmatpush1.msra.mxu0 0.0
    %192 = vmatprep.subr.mxu0 0.0
    %193 = vmatpush1.msra.mxu0 0.0
    %194 = vmatprep.subr.mxu0 0.0
    %195 = vmatpush1.msra.mxu0 0.0
    %196 = vmatprep.subr.mxu0 0.0
    %197 = vmatpush1.msra.mxu0 0.0
    %198 = vmatprep.subr.mxu0 0.0
    %199 = vmatpush1.msra.mxu0 0.0
    %200 = vmatprep.subr.mxu0 0.0
    %201 = vmatpush1.msra.mxu0 0.0
    %202 = vmatprep.subr.mxu0 0.0
    %203 = vmatpush1.msra.mxu0 0.0
    %204 = vmatprep.subr.mxu0 0.0
    %205 = vmatpush1.msra.mxu0 0.0
    %206 = vmatprep.subr.mxu0 0.0
    %207 = vmatpush1.msra.mxu0 0.0
    %208 = vmatprep.subr.mxu0 0.0
    %209 = vmatpush1.msra.mxu0 0.0
    %210 = vmatprep.subr.mxu0 0.0
    %211 = vmatpush1.msra.mxu0 0.0
    %212 = vmatprep.mubr.f32.mxu0 0.0
    %213 = vmatmul.mubr.f32.gmra.mrb[0].mxu0 %v146
    %v214 = vpop.f32.mrb[0].mxu0
    %v215 = vadd.f32 0.0, %v214
    %v216 = vpop.f32.mrb[0].mxu0
    %217 = vdwg.mxu0
    %vm218 = vcmask 130048
    %v220 = vsel %vm218, %v136, 0
    %222 = vmatprep.subr.mxu0 0.0
    %223 = vmatpush1.msra.mxu0 %v138
    %224 = vmatprep.subr.mxu0 0.0
    %225 = vmatpush1.msra.mxu0 %v139
    %226 = vmatprep.subr.mxu0 0.0
    %227 = vmatpush1.msra.mxu0 0.0
    %228 = vmatprep.subr.mxu0 0.0
    %229 = vmatpush1.msra.mxu0 0.0
    %230 = vmatprep.subr.mxu0 0.0
    %231 = vmatpush1.msra.mxu0 0.0
    %232 = vmatprep.subr.mxu0 0.0
    %233 = vmatpush1.msra.mxu0 0.0
    %234 = vmatprep.subr.mxu0 0.0
    %235 = vmatpush1.msra.mxu0 0.0
    %236 = vmatprep.subr.mxu0 0.0
    %237 = vmatpush1.msra.mxu0 0.0
    %238 = vmatprep.subr.mxu0 0.0
    %239 = vmatpush1.msra.mxu0 0.0
    %240 = vmatprep.subr.mxu0 0.0
    %241 = vmatpush1.msra.mxu0 0.0
    %242 = vmatprep.subr.mxu0 0.0
    %243 = vmatpush1.msra.mxu0 0.0
    %244 = vmatprep.subr.mxu0 0.0
    %245 = vmatpush1.msra.mxu0 0.0
    %246 = vmatprep.subr.mxu0 0.0
    %247 = vmatpush1.msra.mxu0 0.0
    %248 = vmatprep.subr.mxu0 0.0
    %249 = vmatpush1.msra.mxu0 0.0
    %250 = vmatprep.subr.mxu0 0.0
    %251 = vmatpush1.msra.mxu0 0.0
    %252 = vmatprep.subr.mxu0 0.0
    %253 = vmatpush1.msra.mxu0 0.0
    %254 = vmatprep.subr.mxu0 0.0
    %255 = vmatpush1.msra.mxu0 0.0
    %256 = vmatprep.subr.mxu0 0.0
    %257 = vmatpush1.msra.mxu0 0.0
    %258 = vmatprep.subr.mxu0 0.0
    %259 = vmatpush1.msra.mxu0 0.0
    %260 = vmatprep.subr.mxu0 0.0
    %261 = vmatpush1.msra.mxu0 0.0
    %262 = vmatprep.subr.mxu0 0.0
    %263 = vmatpush1.msra.mxu0 0.0
    %264 = vmatprep.subr.mxu0 0.0
    %265 = vmatpush1.msra.mxu0 0.0
    %266 = vmatprep.subr.mxu0 0.0
    %267 = vmatpush1.msra.mxu0 0.0
    %268 = vmatprep.subr.mxu0 0.0
    %269 = vmatpush1.msra.mxu0 0.0
    %270 = vmatprep.subr.mxu0 0.0
    %271 = vmatpush1.msra.mxu0 0.0
    %272 = vmatprep.subr.mxu0 0.0
    %273 = vmatpush1.msra.mxu0 0.0
    %274 = vmatprep.subr.mxu0 0.0
    %275 = vmatpush1.msra.mxu0 0.0
    %276 = vmatprep.subr.mxu0 0.0
    %277 = vmatpush1.msra.mxu0 0.0
    %278 = vmatprep.subr.mxu0 0.0
    %279 = vmatpush1.msra.mxu0 0.0
    %280 = vmatprep.subr.mxu0 0.0
    %281 = vmatpush1.msra.mxu0 0.0
    %282 = vmatprep.subr.mxu0 0.0
    %283 = vmatpush1.msra.mxu0 0.0
    %284 = vmatprep.subr.mxu0 0.0
    %285 = vmatpush1.msra.mxu0 0.0
    %286 = vmatprep.mubr.f32.mxu0 0.0
    %287 = vmatmul.mubr.f32.gmra.mrb[0].mxu0 %v220
    %v288 = vpop.f32.mrb[0].mxu0
    %v289 = vadd.f32 %v215, %v288
    %v290 = vpop.f32.mrb[0].mxu0
    %291 = vdwg.mxu0
    %v292 = vld [vmem:[#allocation8] sm:$0x1]
    %v294 = vlaneseq
    %v295 = vshrl.u32 %v294, 7
    %v296 = vsub.s32 0, %v295
    %v297 = vrot.slane %v292, %v296
    %v299 = vadd.f32 %v289, %v297
    %v300 = vxor.u32 %v299, 2147483648
    %v301 = vmul.f32 %v300, 1.442695
    %v302 = vpow.pop %v301
    %v303 = vadd.f32 %v302, 1.0
    %v304 = vrcp.pop %v303
    %v305 = vmul.f32 1.0, %v304
    %307 = vrot.lane.b32.xlu0 %v299, 32
    %v308 = vpop.permute.xlu0 %307
    %v310 = vmul.f32 %v305, %v308
    %312 = vrot.lane.b32.xlu0 %v310, 64
    %v313 = vpop.permute.xlu0 %312
    %v315 = vadd.f32 %v299, %v313
    %v316 = vtanh.pop %v315
    %v317 = vsub.f32 1.0, %v305
    %319 = vrot.lane.b32.xlu0 %v316, 96
    %v320 = vpop.permute.xlu0 %319
    %v322 = vmul.f32 %v317, %v320
    %323 = vrot.lane.b32.xlu0 %v137, 32
    %v324 = vpop.permute.xlu0 %323
    %v326 = vmul.f32 %v305, %v324
    %v327 = vadd.f32 %v322, %v326
    %s328 = sld [smem:[#allocation14]]
    %s329 = sld [smem:[#allocation14 + $0x1]]
    %s330 = sld [smem:[#allocation14 + $0x2]]
    %v331 = vld [vmem:[#allocation9] sm:$0xff]
    %v332 = vld [vmem:[#allocation9 + $0x8] sm:$0xff]
    %v333 = vld [vmem:[#allocation9 + $0x10] sm:$0xff]
    %v334 = vld [vmem:[#allocation9 + $0x18] sm:$0xff]
    %336 = vrot.lane.b32.xlu0 %v327, 96
    %v337 = vpop.permute.xlu0 %336
    %v338 = vsel %vm144, %v337, 0
    %340 = vmatprep.subr.mxu0 0.0
    %341 = vmatpush1.msra.mxu0 %v331
    %342 = vmatprep.subr.mxu0 0.0
    %343 = vmatpush1.msra.mxu0 %v332
    %344 = vmatprep.subr.mxu0 0.0
    %345 = vmatpush1.msra.mxu0 %v333
    %346 = vmatprep.subr.mxu0 0.0
    %347 = vmatpush1.msra.mxu0 %v334
    %348 = vmatprep.subr.mxu0 0.0
    %349 = vmatpush1.msra.mxu0 0.0
    %350 = vmatprep.subr.mxu0 0.0
    %351 = vmatpush1.msra.mxu0 0.0
    %352 = vmatprep.subr.mxu0 0.0
    %353 = vmatpush1.msra.mxu0 0.0
    %354 = vmatprep.subr.mxu0 0.0
    %355 = vmatpush1.msra.mxu0 0.0
    %356 = vmatprep.subr.mxu0 0.0
    %357 = vmatpush1.msra.mxu0 0.0
    %358 = vmatprep.subr.mxu0 0.0
    %359 = vmatpush1.msra.mxu0 0.0
    %360 = vmatprep.subr.mxu0 0.0
    %361 = vmatpush1.msra.mxu0 0.0
    %362 = vmatprep.subr.mxu0 0.0
    %363 = vmatpush1.msra.mxu0 0.0
    %364 = vmatprep.subr.mxu0 0.0
    %365 = vmatpush1.msra.mxu0 0.0
    %366 = vmatprep.subr.mxu0 0.0
    %367 = vmatpush1.msra.mxu0 0.0
    %368 = vmatprep.subr.mxu0 0.0
    %369 = vmatpush1.msra.mxu0 0.0
    %370 = vmatprep.subr.mxu0 0.0
    %371 = vmatpush1.msra.mxu0 0.0
    %372 = vmatprep.subr.mxu0 0.0
    %373 = vmatpush1.msra.mxu0 0.0
    %374 = vmatprep.subr.mxu0 0.0
    %375 = vmatpush1.msra.mxu0 0.0
    %376 = vmatprep.subr.mxu0 0.0
    %377 = vmatpush1.msra.mxu0 0.0
    %378 = vmatprep.subr.mxu0 0.0
    %379 = vmatpush1.msra.mxu0 0.0
    %380 = vmatprep.subr.mxu0 0.0
    %381 = vmatpush1.msra.mxu0 0.0
    %382 = vmatprep.subr.mxu0 0.0
    %383 = vmatpush1.msra.mxu0 0.0
    %384 = vmatprep.subr.mxu0 0.0
    %385 = vmatpush1.msra.mxu0 0.0
    %386 = vmatprep.subr.mxu0 0.0
    %387 = vmatpush1.msra.mxu0 0.0
    %388 = vmatprep.subr.mxu0 0.0
    %389 = vmatpush1.msra.mxu0 0.0
    %390 = vmatprep.subr.mxu0 0.0
    %391 = vmatpush1.msra.mxu0 0.0
    %392 = vmatprep.subr.mxu0 0.0
    %393 = vmatpush1.msra.mxu0 0.0
    %394 = vmatprep.subr.mxu0 0.0
    %395 = vmatpush1.msra.mxu0 0.0
    %396 = vmatprep.subr.mxu0 0.0
    %397 = vmatpush1.msra.mxu0 0.0
    %398 = vmatprep.subr.mxu0 0.0
    %399 = vmatpush1.msra.mxu0 0.0
    %400 = vmatprep.subr.mxu0 0.0
    %401 = vmatpush1.msra.mxu0 0.0
    %402 = vmatprep.subr.mxu0 0.0
    %403 = vmatpush1.msra.mxu0 0.0
    %404 = vmatprep.mubr.f32.mxu0 0.0
    %405 = vmatmul.mubr.f32.gmra.mrb[0].mxu0 %v338
    %v406 = vpop.f32.mrb[0].mxu0
    %v407 = vadd.f32 0.0, %v406
    %v408 = vpop.f32.mrb[0].mxu0
    %409 = vdwg.mxu0
    %v410 = vld [vmem:[%s2] sm:$0xff]
    %v411 = vld [vmem:[%s2 + $0x8] sm:$0xff]
    %v414 = vunpack.c.l.s4 1966171168
    %v415 = vunpack.c.0.s8 %v414
    %v416 = vlaneseq
    %v417 = vshrl.u32 %v416, 7
    %v418 = vsub.s32 %v415, %v417
    %v419 = vrot.slane %v407, %v418
    %v420 = vcombine.high %v419, %v419
    %v422 = vunpack.c.l.s4 1966171168
    %v423 = vunpack.c.0.s8 %v422
    %v424 = vlaneseq
    %v425 = vshrl.u32 %v424, 7
    %v426 = vsub.s32 %v423, %v425
    %v427 = vrot.slane %v419, %v426
    %v429 = vunpack.c.l.s4 1966171168
    %v430 = vunpack.c.0.s8 %v429
    %v431 = vlaneseq
    %v432 = vshrl.u32 %v431, 7
    %v433 = vsub.s32 %v430, %v432
    %v434 = vrot.slane %v420, %v433
    %v435 = vlaneseq
    %v436 = vshrl.u32 %v435, 7
    %v437 = vsub.s32 0, %v436
    %v438 = vrot.slane %v427, %v437
    %v439 = vlaneseq
    %v440 = vshrl.u32 %v439, 7
    %v441 = vsub.s32 0, %v440
    %v442 = vrot.slane %v434, %v441
    %v445 = vmul.f32 %v438, %v410
    %v446 = vmul.f32 %v442, %v411
    %v447 = vsel %vm144, %v445, 0.0
    %448 = vadd.xlane.f32.xlu0 %v447
    %v449 = vpop.xlane.xlu0 %448
    %v450 = vsel %vm144, %v446, 0.0
    %451 = vadd.xlane.f32.xlu0 %v450
    %v452 = vpop.xlane.xlu0 %451
    %v453 = vstv %s328
    %v454 = vadd.f32 %v449, %v453
    %v455 = vadd.f32 %v452, %v453
    %v456 = vld [vmem:[%s4] sm:$0x3]
    %v457 = vadd.f32 %v456, 1e-06
    %v458 = vlog2.pop %v457
    %v459 = vmul.f32 %v458, 0.6931472
    %v460 = vstv %s329
    %v461 = vmul.f32 %v460, %v459
    %v463 = vlaneseq
    %v464 = vshrl.u32 %v463, 7
    %v465 = vsub.s32 0, %v464
    %v466 = vrot.slane %v461, %v465
    %468 = vbcast.lane.b32.xlu0 %v466, 256
    %v469 = vpop.permute.xlu0 %468
    %v470 = vlaneseq
    %v471 = vshrl.u32 %v470, 7
    %v472 = vsub.s32 1, %v471
    %v473 = vrot.slane %v461, %v472
    %475 = vbcast.lane.b32.xlu0 %v473, 256
    %v476 = vpop.permute.xlu0 %475
    %v479 = vadd.f32 %v454, %v469
    %v480 = vadd.f32 %v455, %v476
    %483 = vset.pattern.permute.xlu0 0
    %484 = vperm.xlu0 %483, %v479
    %v485 = vpop.permute.xlu0 %484
    %486 = vset.pattern.permute.xlu0 0
    %487 = vperm.xlu0 %486, %v480
    %v488 = vpop.permute.xlu0 %487
    %v489 = vlaneseq
    %v490 = vand.u32 %v489, 127
    %v491 = vlaneseq
    %v492 = vshrl.u32 %v491, 7
    %v493 = vsub.s32 %v490, %v492
    %v494 = vrot.slane %v485, %v493
    %v495 = vlaneseq
    %v496 = vshrl.u32 %v495, 7
    %v497 = vsub.s32 %v490, %v496
    %v498 = vrot.slane %v488, %v497
    %vm499 = vcmask 1041409
    %v500 = vsel %vm499, %v498, %v494
    %vm502 = vcmask 58368
    %v503 = vsel %vm502, %v500, -inf
    %504 = vmax.xlane.f32.xlu0 %v503
    %v505 = vpop.xlane.xlu0 %504
    %v507 = vlaneseq
    %v508 = vshrl.u32 %v507, 7
    %v509 = vsub.s32 0, %v508
    %v510 = vrot.slane %v505, %v509
    %v511 = vlaneseq
    %v512 = vshrl.u32 %v511, 7
    %v513 = vsub.s32 1, %v512
    %v514 = vrot.slane %v505, %v513
    %v517 = vsub.f32 %v479, %v510
    %v518 = vsub.f32 %v480, %v514
    %v519 = vmul.f32 %v517, 1.442695
    %v520 = vpow.pop %v519
    %v521 = vmul.f32 %v518, 1.442695
    %v522 = vpow.pop %v521
    %525 = vset.pattern.permute.xlu0 0
    %526 = vperm.xlu0 %525, %v520
    %v527 = vpop.permute.xlu0 %526
    %528 = vset.pattern.permute.xlu0 0
    %529 = vperm.xlu0 %528, %v522
    %v530 = vpop.permute.xlu0 %529
    %v531 = vlaneseq
    %v532 = vshrl.u32 %v531, 7
    %v533 = vsub.s32 %v490, %v532
    %v534 = vrot.slane %v527, %v533
    %v535 = vlaneseq
    %v536 = vshrl.u32 %v535, 7
    %v537 = vsub.s32 %v490, %v536
    %v538 = vrot.slane %v530, %v537
    %v539 = vsel %vm499, %v538, %v534
    %v541 = vsel %vm502, %v539, 0.0
    %542 = vadd.xlane.f32.xlu0 %v541
    %v543 = vpop.xlane.xlu0 %542
    %v544 = vrcp.pop %v543
    %v546 = vlaneseq
    %v547 = vshrl.u32 %v546, 7
    %v548 = vsub.s32 0, %v547
    %v549 = vrot.slane %v544, %v548
    %v550 = vlaneseq
    %v551 = vshrl.u32 %v550, 7
    %v552 = vsub.s32 1, %v551
    %v553 = vrot.slane %v544, %v552
    %v556 = vmul.f32 %v520, %v549
    %v557 = vmul.f32 %v522, %v553
    %559 = vset.pattern.permute.xlu0 0
    %560 = vperm.xlu0 %559, %v556
    %v561 = vpop.permute.xlu0 %560
    %564 = vset.pattern.permute.xlu0 0
    %565 = vperm.xlu0 %564, %v557
    %v566 = vpop.permute.xlu0 %565
    %v568 = vmul.f32 %v561, %v410
    %v569 = vmul.f32 %v566, %v411
    %v570 = vsel %vm144, %v568, 0.0
    %v571 = vrot.slane %v570, 4
    %v572 = vadd.f32 %v570, %v571
    %v573 = vrot.slane %v572, 2
    %v574 = vadd.f32 %v572, %v573
    %v575 = vrot.slane %v574, 1
    %v576 = vadd.f32 %v574, %v575
    %v577 = vsel %vm144, %v569, 0.0
    %v578 = vrot.slane %v577, 4
    %v579 = vadd.f32 %v577, %v578
    %v580 = vrot.slane %v579, 2
    %v581 = vadd.f32 %v579, %v580
    %v582 = vrot.slane %v581, 1
    %v583 = vadd.f32 %v581, %v582
    %v584 = vld [vmem:[%s3] sm:$0xf]
    %v585 = vld [vmem:[%s3 + $0x4] sm:$0xf]
    %588 = vrot.lane.b32.xlu0 %v584, 32
    %v589 = vpop.permute.xlu0 %588
    %590 = vrot.lane.b32.xlu0 %v585, 32
    %v591 = vpop.permute.xlu0 %590
    %v594 = vmul.f32 %v438, %v589
    %v595 = vmul.f32 %v442, %v591
    %598 = vrot.lane.b32.xlu0 %v594, 96
    %v599 = vpop.permute.xlu0 %598
    %600 = vrot.lane.b32.xlu0 %v595, 96
    %v601 = vpop.permute.xlu0 %600
    %vm604 = vcmask 257024
    %v605 = vsel %vm604, %v599, 0.0
    %606 = vadd.xlane.f32.xlu0 %v605
    %v607 = vpop.xlane.xlu0 %606
    %v608 = vsel %vm604, %v601, 0.0
    %609 = vadd.xlane.f32.xlu0 %v608
    %v610 = vpop.xlane.xlu0 %609
    %v611 = vstv %s330
    %v612 = vadd.f32 %v607, %v611
    %v613 = vadd.f32 %v610, %v611
    %v616 = vlaneseq
    %v617 = vshrl.u32 %v616, 7
    %v618 = vsub.s32 %v490, %v617
    %v619 = vrot.slane %v612, %v618
    %v620 = vlaneseq
    %v621 = vshrl.u32 %v620, 7
    %v622 = vsub.s32 %v490, %v621
    %v623 = vrot.slane %v613, %v622
    %v624 = vsel %vm499, %v623, %v619
    %vm626 = vcmask 25600
    %v627 = vsel %vm626, %v624, -inf
    %628 = vmax.xlane.f32.xlu0 %v627
    %v629 = vpop.xlane.xlu0 %628
    %v631 = vlaneseq
    %v632 = vshrl.u32 %v631, 7
    %v633 = vsub.s32 0, %v632
    %v634 = vrot.slane %v629, %v633
    %v635 = vlaneseq
    %v636 = vshrl.u32 %v635, 7
    %v637 = vsub.s32 1, %v636
    %v638 = vrot.slane %v629, %v637
    %v641 = vsub.f32 %v612, %v634
    %v642 = vsub.f32 %v613, %v638
    %v643 = vmul.f32 %v641, 1.442695
    %v644 = vpow.pop %v643
    %v645 = vmul.f32 %v642, 1.442695
    %v646 = vpow.pop %v645
    %649 = vset.pattern.permute.xlu0 0
    %650 = vperm.xlu0 %649, %v644
    %v651 = vpop.permute.xlu0 %650
    %652 = vset.pattern.permute.xlu0 0
    %653 = vperm.xlu0 %652, %v646
    %v654 = vpop.permute.xlu0 %653
    %v655 = vlaneseq
    %v656 = vshrl.u32 %v655, 7
    %v657 = vsub.s32 %v490, %v656
    %v658 = vrot.slane %v651, %v657
    %v659 = vlaneseq
    %v660 = vshrl.u32 %v659, 7
    %v661 = vsub.s32 %v490, %v660
    %v662 = vrot.slane %v654, %v661
    %v663 = vsel %vm499, %v662, %v658
    %v665 = vsel %vm626, %v663, 0.0
    %666 = vadd.xlane.f32.xlu0 %v665
    %v667 = vpop.xlane.xlu0 %666
    %v668 = vrcp.pop %v667
    %v670 = vlaneseq
    %v671 = vshrl.u32 %v670, 7
    %v672 = vsub.s32 0, %v671
    %v673 = vrot.slane %v668, %v672
    %v674 = vlaneseq
    %v675 = vshrl.u32 %v674, 7
    %v676 = vsub.s32 1, %v675
    %v677 = vrot.slane %v668, %v676
    %v680 = vmul.f32 %v644, %v673
    %v681 = vmul.f32 %v646, %v677
    %683 = vset.pattern.permute.xlu0 0
    %684 = vperm.xlu0 %683, %v680
    %v685 = vpop.permute.xlu0 %684
    %688 = vset.pattern.permute.xlu0 0
    %689 = vperm.xlu0 %688, %v681
    %v690 = vpop.permute.xlu0 %689
    %v692 = vmul.f32 %v685, %v584
    %v693 = vmul.f32 %v690, %v585
    %v694 = vsel %vm604, %v692, 0.0
    %v695 = vrot.slane %v694, 4
    %v696 = vadd.f32 %v694, %v695
    %v697 = vrot.slane %v696, 2
    %v698 = vadd.f32 %v696, %v697
    %v699 = vrot.slane %v698, 1
    %v700 = vadd.f32 %v698, %v699
    %v701 = vsel %vm604, %v693, 0.0
    %v702 = vrot.slane %v701, 4
    %v703 = vadd.f32 %v701, %v702
    %v704 = vrot.slane %v703, 2
    %v705 = vadd.f32 %v703, %v704
    %v706 = vrot.slane %v705, 1
    %v707 = vadd.f32 %v705, %v706
    %v708 = vld [vmem:[#allocation11] sm:$0xff]
    %v709 = vld [vmem:[#allocation11 + $0x8] sm:$0xff]
    %v710 = vld [vmem:[#allocation11 + $0x10] sm:$0xff]
    %v711 = vld [vmem:[#allocation11 + $0x18] sm:$0xff]
    %v712 = vld [vmem:[#allocation11 + $0x20] sm:$0xff]
    %v713 = vld [vmem:[#allocation11 + $0x28] sm:$0xff]
    %v714 = vld [vmem:[#allocation11 + $0x30] sm:$0xff]
    %v715 = vld [vmem:[#allocation11 + $0x38] sm:$0xff]
    %v718 = vsel %vm499, %v583, %v576
    %v719 = vsel %vm144, %v718, 0
    %721 = vmatprep.subr.mxu0 0.0
    %722 = vmatpush1.msra.mxu0 %v712
    %723 = vmatprep.subr.mxu0 0.0
    %724 = vmatpush1.msra.mxu0 %v713
    %725 = vmatprep.subr.mxu0 0.0
    %726 = vmatpush1.msra.mxu0 %v714
    %727 = vmatprep.subr.mxu0 0.0
    %728 = vmatpush1.msra.mxu0 %v715
    %729 = vmatprep.subr.mxu0 0.0
    %730 = vmatpush1.msra.mxu0 0.0
    %731 = vmatprep.subr.mxu0 0.0
    %732 = vmatpush1.msra.mxu0 0.0
    %733 = vmatprep.subr.mxu0 0.0
    %734 = vmatpush1.msra.mxu0 0.0
    %735 = vmatprep.subr.mxu0 0.0
    %736 = vmatpush1.msra.mxu0 0.0
    %737 = vmatprep.subr.mxu0 0.0
    %738 = vmatpush1.msra.mxu0 0.0
    %739 = vmatprep.subr.mxu0 0.0
    %740 = vmatpush1.msra.mxu0 0.0
    %741 = vmatprep.subr.mxu0 0.0
    %742 = vmatpush1.msra.mxu0 0.0
    %743 = vmatprep.subr.mxu0 0.0
    %744 = vmatpush1.msra.mxu0 0.0
    %745 = vmatprep.subr.mxu0 0.0
    %746 = vmatpush1.msra.mxu0 0.0
    %747 = vmatprep.subr.mxu0 0.0
    %748 = vmatpush1.msra.mxu0 0.0
    %749 = vmatprep.subr.mxu0 0.0
    %750 = vmatpush1.msra.mxu0 0.0
    %751 = vmatprep.subr.mxu0 0.0
    %752 = vmatpush1.msra.mxu0 0.0
    %753 = vmatprep.subr.mxu0 0.0
    %754 = vmatpush1.msra.mxu0 0.0
    %755 = vmatprep.subr.mxu0 0.0
    %756 = vmatpush1.msra.mxu0 0.0
    %757 = vmatprep.subr.mxu0 0.0
    %758 = vmatpush1.msra.mxu0 0.0
    %759 = vmatprep.subr.mxu0 0.0
    %760 = vmatpush1.msra.mxu0 0.0
    %761 = vmatprep.subr.mxu0 0.0
    %762 = vmatpush1.msra.mxu0 0.0
    %763 = vmatprep.subr.mxu0 0.0
    %764 = vmatpush1.msra.mxu0 0.0
    %765 = vmatprep.subr.mxu0 0.0
    %766 = vmatpush1.msra.mxu0 0.0
    %767 = vmatprep.subr.mxu0 0.0
    %768 = vmatpush1.msra.mxu0 0.0
    %769 = vmatprep.subr.mxu0 0.0
    %770 = vmatpush1.msra.mxu0 0.0
    %771 = vmatprep.subr.mxu0 0.0
    %772 = vmatpush1.msra.mxu0 0.0
    %773 = vmatprep.subr.mxu0 0.0
    %774 = vmatpush1.msra.mxu0 0.0
    %775 = vmatprep.subr.mxu0 0.0
    %776 = vmatpush1.msra.mxu0 0.0
    %777 = vmatprep.subr.mxu0 0.0
    %778 = vmatpush1.msra.mxu0 0.0
    %779 = vmatprep.subr.mxu0 0.0
    %780 = vmatpush1.msra.mxu0 0.0
    %781 = vmatprep.subr.mxu0 0.0
    %782 = vmatpush1.msra.mxu0 0.0
    %783 = vmatprep.subr.mxu0 0.0
    %784 = vmatpush1.msra.mxu0 0.0
    %785 = vmatprep.mubr.f32.mxu0 0.0
    %786 = vmatmul.mubr.f32.gmra.mrb[0].mxu0 %v719
    %v787 = vpop.f32.mrb[0].mxu0
    %v788 = vadd.f32 0.0, %v787
    %v789 = vpop.f32.mrb[0].mxu0
    %790 = vdwg.mxu0
    %791 = vmatprep.subr.mxu0 0.0
    %792 = vmatpush1.msra.mxu0 %v708
    %793 = vmatprep.subr.mxu0 0.0
    %794 = vmatpush1.msra.mxu0 %v709
    %795 = vmatprep.subr.mxu0 0.0
    %796 = vmatpush1.msra.mxu0 %v710
    %797 = vmatprep.subr.mxu0 0.0
    %798 = vmatpush1.msra.mxu0 %v711
    %799 = vmatprep.subr.mxu0 0.0
    %800 = vmatpush1.msra.mxu0 0.0
    %801 = vmatprep.subr.mxu0 0.0
    %802 = vmatpush1.msra.mxu0 0.0
    %803 = vmatprep.subr.mxu0 0.0
    %804 = vmatpush1.msra.mxu0 0.0
    %805 = vmatprep.subr.mxu0 0.0
    %806 = vmatpush1.msra.mxu0 0.0
    %807 = vmatprep.subr.mxu0 0.0
    %808 = vmatpush1.msra.mxu0 0.0
    %809 = vmatprep.subr.mxu0 0.0
    %810 = vmatpush1.msra.mxu0 0.0
    %811 = vmatprep.subr.mxu0 0.0
    %812 = vmatpush1.msra.mxu0 0.0
    %813 = vmatprep.subr.mxu0 0.0
    %814 = vmatpush1.msra.mxu0 0.0
    %815 = vmatprep.subr.mxu0 0.0
    %816 = vmatpush1.msra.mxu0 0.0
    %817 = vmatprep.subr.mxu0 0.0
    %818 = vmatpush1.msra.mxu0 0.0
    %819 = vmatprep.subr.mxu0 0.0
    %820 = vmatpush1.msra.mxu0 0.0
    %821 = vmatprep.subr.mxu0 0.0
    %822 = vmatpush1.msra.mxu0 0.0
    %823 = vmatprep.subr.mxu0 0.0
    %824 = vmatpush1.msra.mxu0 0.0
    %825 = vmatprep.subr.mxu0 0.0
    %826 = vmatpush1.msra.mxu0 0.0
    %827 = vmatprep.subr.mxu0 0.0
    %828 = vmatpush1.msra.mxu0 0.0
    %829 = vmatprep.subr.mxu0 0.0
    %830 = vmatpush1.msra.mxu0 0.0
    %831 = vmatprep.subr.mxu0 0.0
    %832 = vmatpush1.msra.mxu0 0.0
    %833 = vmatprep.subr.mxu0 0.0
    %834 = vmatpush1.msra.mxu0 0.0
    %835 = vmatprep.subr.mxu0 0.0
    %836 = vmatpush1.msra.mxu0 0.0
    %837 = vmatprep.subr.mxu0 0.0
    %838 = vmatpush1.msra.mxu0 0.0
    %839 = vmatprep.subr.mxu0 0.0
    %840 = vmatpush1.msra.mxu0 0.0
    %841 = vmatprep.subr.mxu0 0.0
    %842 = vmatpush1.msra.mxu0 0.0
    %843 = vmatprep.subr.mxu0 0.0
    %844 = vmatpush1.msra.mxu0 0.0
    %845 = vmatprep.subr.mxu0 0.0
    %846 = vmatpush1.msra.mxu0 0.0
    %847 = vmatprep.subr.mxu0 0.0
    %848 = vmatpush1.msra.mxu0 0.0
    %849 = vmatprep.subr.mxu0 0.0
    %850 = vmatpush1.msra.mxu0 0.0
    %851 = vmatprep.subr.mxu0 0.0
    %852 = vmatpush1.msra.mxu0 0.0
    %853 = vmatprep.subr.mxu0 0.0
    %854 = vmatpush1.msra.mxu0 0.0
    %855 = vmatprep.mubr.f32.mxu0 0.0
    %856 = vmatmul.mubr.f32.gmra.mrb[0].mxu0 %v338
    %v857 = vpop.f32.mrb[0].mxu0
    %v858 = vadd.f32 %v788, %v857
    %v859 = vpop.f32.mrb[0].mxu0
    %860 = vdwg.mxu0
    %v861 = vld [vmem:[#allocation11 + $0x40] sm:$0xff]
    %v862 = vld [vmem:[#allocation11 + $0x48] sm:$0xff]
    %v863 = vld [vmem:[#allocation11 + $0x50] sm:$0xff]
    %v864 = vld [vmem:[#allocation11 + $0x58] sm:$0xff]
    %v867 = vsel %vm499, %v707, %v700
    %v868 = vsel %vm144, %v867, 0
    %870 = vmatprep.subr.mxu0 0.0
    %871 = vmatpush1.msra.mxu0 %v861
    %872 = vmatprep.subr.mxu0 0.0
    %873 = vmatpush1.msra.mxu0 %v862
    %874 = vmatprep.subr.mxu0 0.0
    %875 = vmatpush1.msra.mxu0 %v863
    %876 = vmatprep.subr.mxu0 0.0
    %877 = vmatpush1.msra.mxu0 %v864
    %878 = vmatprep.subr.mxu0 0.0
    %879 = vmatpush1.msra.mxu0 0.0
    %880 = vmatprep.subr.mxu0 0.0
    %881 = vmatpush1.msra.mxu0 0.0
    %882 = vmatprep.subr.mxu0 0.0
    %883 = vmatpush1.msra.mxu0 0.0
    %884 = vmatprep.subr.mxu0 0.0
    %885 = vmatpush1.msra.mxu0 0.0
    %886 = vmatprep.subr.mxu0 0.0
    %887 = vmatpush1.msra.mxu0 0.0
    %888 = vmatprep.subr.mxu0 0.0
    %889 = vmatpush1.msra.mxu0 0.0
    %890 = vmatprep.subr.mxu0 0.0
    %891 = vmatpush1.msra.mxu0 0.0
    %892 = vmatprep.subr.mxu0 0.0
    %893 = vmatpush1.msra.mxu0 0.0
    %894 = vmatprep.subr.mxu0 0.0
    %895 = vmatpush1.msra.mxu0 0.0
    %896 = vmatprep.subr.mxu0 0.0
    %897 = vmatpush1.msra.mxu0 0.0
    %898 = vmatprep.subr.mxu0 0.0
    %899 = vmatpush1.msra.mxu0 0.0
    %900 = vmatprep.subr.mxu0 0.0
    %901 = vmatpush1.msra.mxu0 0.0
    %902 = vmatprep.subr.mxu0 0.0
    %903 = vmatpush1.msra.mxu0 0.0
    %904 = vmatprep.subr.mxu0 0.0
    %905 = vmatpush1.msra.mxu0 0.0
    %906 = vmatprep.subr.mxu0 0.0
    %907 = vmatpush1.msra.mxu0 0.0
    %908 = vmatprep.subr.mxu0 0.0
    %909 = vmatpush1.msra.mxu0 0.0
    %910 = vmatprep.subr.mxu0 0.0
    %911 = vmatpush1.msra.mxu0 0.0
    %912 = vmatprep.subr.mxu0 0.0
    %913 = vmatpush1.msra.mxu0 0.0
    %914 = vmatprep.subr.mxu0 0.0
    %915 = vmatpush1.msra.mxu0 0.0
    %916 = vmatprep.subr.mxu0 0.0
    %917 = vmatpush1.msra.mxu0 0.0
    %918 = vmatprep.subr.mxu0 0.0
    %919 = vmatpush1.msra.mxu0 0.0
    %920 = vmatprep.subr.mxu0 0.0
    %921 = vmatpush1.msra.mxu0 0.0
    %922 = vmatprep.subr.mxu0 0.0
    %923 = vmatpush1.msra.mxu0 0.0
    %924 = vmatprep.subr.mxu0 0.0
    %925 = vmatpush1.msra.mxu0 0.0
    %926 = vmatprep.subr.mxu0 0.0
    %927 = vmatpush1.msra.mxu0 0.0
    %928 = vmatprep.subr.mxu0 0.0
    %929 = vmatpush1.msra.mxu0 0.0
    %930 = vmatprep.subr.mxu0 0.0
    %931 = vmatpush1.msra.mxu0 0.0
    %932 = vmatprep.subr.mxu0 0.0
    %933 = vmatpush1.msra.mxu0 0.0
    %934 = vmatprep.mubr.f32.mxu0 0.0
    %935 = vmatmul.mubr.f32.gmra.mrb[0].mxu0 %v868
    %v936 = vpop.f32.mrb[0].mxu0
    %v937 = vadd.f32 0.0, %v936
    %v938 = vpop.f32.mrb[0].mxu0
    %939 = vdwg.mxu0
    %v940 = vadd.f32 %v858, %v937
    %v941 = vld [vmem:[#allocation12] sm:$0x1]
    %v943 = vlaneseq
    %v944 = vshrl.u32 %v943, 7
    %v945 = vsub.s32 0, %v944
    %v946 = vrot.slane %v941, %v945
    %v948 = vadd.f32 %v940, %v946
    %v949 = vxor.u32 %v948, 2147483648
    %v950 = vmul.f32 %v949, 1.442695
    %v951 = vpow.pop %v950
    %v952 = vadd.f32 %v951, 1.0
    %v953 = vrcp.pop %v952
    %v954 = vmul.f32 1.0, %v953
    %vm955 = vcmp.eq.s32.totalorder %v490, 127
    %v956 = vsel %vm955, -1e+30, %v948
    %vm957 = vcmask 1041408
    %v958 = vsel %vm957, %v956, -inf
    %959 = vmax.xlane.f32.xlu0 %v958
    %v960 = vpop.xlane.xlu0 %959
    %v961 = vsub.f32 %v956, %v960
    %v962 = vmul.f32 %v961, 1.442695
    %v963 = vpow.pop %v962
    %v964 = vsel %vm957, %v963, 0.0
    %965 = vadd.xlane.f32.xlu0 %v964
    %v966 = vpop.xlane.xlu0 %965
    %v967 = vrcp.pop %v966
    %v968 = vmul.f32 %v963, %v967
    %v969 = vsub.f32 1.0, %v954
    %971 = vset.pattern.permute.xlu0 127
    %972 = vperm.xlu0 %971, %v969
    %v973 = vpop.permute.xlu0 %972
    %v975 = vmul.f32 %v973, %v968
    %v976 = vld [vmem:[%s5] sm:$0x3]
    %978 = vset.pattern.permute.xlu0 127
    %979 = vperm.xlu0 %978, %v954
    %v980 = vpop.permute.xlu0 %979
    %v982 = vlaneseq
    %v983 = vshrl.u32 %v982, 7
    %v984 = vsub.s32 %v490, %v983
    %v985 = vrot.slane %v561, %v984
    %v986 = vlaneseq
    %v987 = vshrl.u32 %v986, 7
    %v988 = vsub.s32 %v490, %v987
    %v989 = vrot.slane %v566, %v988
    %v990 = vsel %vm499, %v989, %v985
    %v992 = vmul.f32 %v980, %v990
    %v993 = vlaneseq
    %v994 = vshrl.u32 %v993, 7
    %v995 = vsub.s32 0, %v994
    %v996 = vrot.slane %v976, %v995
    %998 = vbcast.lane.b32.xlu0 %v996, 256
    %v999 = vpop.permute.xlu0 %998
    %v1000 = vlaneseq
    %v1001 = vshrl.u32 %v1000, 7
    %v1002 = vsub.s32 1, %v1001
    %v1003 = vrot.slane %v976, %v1002
    %1005 = vbcast.lane.b32.xlu0 %v1003, 256
    %v1006 = vpop.permute.xlu0 %1005
    %vm1007 = vcmp.eq.s32.totalorder %v999, %v490
    %vm1008 = vcmp.eq.s32.totalorder %v1006, %v490
    %v1009 = vsel %vm1007, 1, 0
    %v1010 = vsel %vm1008, 1, 0
    %v1011 = vcvt.s32.f32 %v1009
    %v1012 = vcvt.s32.f32 %v1010
    %v1015 = vunpack.c.l.s4 1966171168
    %v1016 = vunpack.c.0.s8 %v1015
    %v1017 = vlaneseq
    %v1018 = vshrl.u32 %v1017, 7
    %v1019 = vsub.s32 %v1016, %v1018
    %v1020 = vrot.slane %v992, %v1019
    %v1021 = vcombine.high %v1020, %v1020
    %v1023 = vunpack.c.l.s4 1966171168
    %v1024 = vunpack.c.0.s8 %v1023
    %v1025 = vlaneseq
    %v1026 = vshrl.u32 %v1025, 7
    %v1027 = vsub.s32 %v1024, %v1026
    %v1028 = vrot.slane %v1020, %v1027
    %v1030 = vunpack.c.l.s4 1966171168
    %v1031 = vunpack.c.0.s8 %v1030
    %v1032 = vlaneseq
    %v1033 = vshrl.u32 %v1032, 7
    %v1034 = vsub.s32 %v1031, %v1033
    %v1035 = vrot.slane %v1021, %v1034
    %vm1036 = vcmask 64512
    %v1037 = vsel %vm1036, %v1028, 0
    %1039 = vmatprep.subr.mxu0 0.0
    %1040 = vmatpush1.msra.mxu0 %v1011
    %1041 = vmatprep.subr.mxu0 0.0
    %1042 = vmatpush1.msra.mxu0 0.0
    %1043 = vmatprep.subr.mxu0 0.0
    %1044 = vmatpush1.msra.mxu0 0.0
    %1045 = vmatprep.subr.mxu0 0.0
    %1046 = vmatpush1.msra.mxu0 0.0
    %1047 = vmatprep.subr.mxu0 0.0
    %1048 = vmatpush1.msra.mxu0 0.0
    %1049 = vmatprep.subr.mxu0 0.0
    %1050 = vmatpush1.msra.mxu0 0.0
    %1051 = vmatprep.subr.mxu0 0.0
    %1052 = vmatpush1.msra.mxu0 0.0
    %1053 = vmatprep.subr.mxu0 0.0
    %1054 = vmatpush1.msra.mxu0 0.0
    %1055 = vmatprep.subr.mxu0 0.0
    %1056 = vmatpush1.msra.mxu0 0.0
    %1057 = vmatprep.subr.mxu0 0.0
    %1058 = vmatpush1.msra.mxu0 0.0
    %1059 = vmatprep.subr.mxu0 0.0
    %1060 = vmatpush1.msra.mxu0 0.0
    %1061 = vmatprep.subr.mxu0 0.0
    %1062 = vmatpush1.msra.mxu0 0.0
    %1063 = vmatprep.subr.mxu0 0.0
    %1064 = vmatpush1.msra.mxu0 0.0
    %1065 = vmatprep.subr.mxu0 0.0
    %1066 = vmatpush1.msra.mxu0 0.0
    %1067 = vmatprep.subr.mxu0 0.0
    %1068 = vmatpush1.msra.mxu0 0.0
    %1069 = vmatprep.subr.mxu0 0.0
    %1070 = vmatpush1.msra.mxu0 0.0
    %1071 = vmatprep.subr.mxu0 0.0
    %1072 = vmatpush1.msra.mxu0 0.0
    %1073 = vmatprep.subr.mxu0 0.0
    %1074 = vmatpush1.msra.mxu0 0.0
    %1075 = vmatprep.subr.mxu0 0.0
    %1076 = vmatpush1.msra.mxu0 0.0
    %1077 = vmatprep.subr.mxu0 0.0
    %1078 = vmatpush1.msra.mxu0 0.0
    %1079 = vmatprep.subr.mxu0 0.0
    %1080 = vmatpush1.msra.mxu0 0.0
    %1081 = vmatprep.subr.mxu0 0.0
    %1082 = vmatpush1.msra.mxu0 0.0
    %1083 = vmatprep.subr.mxu0 0.0
    %1084 = vmatpush1.msra.mxu0 0.0
    %1085 = vmatprep.subr.mxu0 0.0
    %1086 = vmatpush1.msra.mxu0 0.0
    %1087 = vmatprep.subr.mxu0 0.0
    %1088 = vmatpush1.msra.mxu0 0.0
    %1089 = vmatprep.subr.mxu0 0.0
    %1090 = vmatpush1.msra.mxu0 0.0
    %1091 = vmatprep.subr.mxu0 0.0
    %1092 = vmatpush1.msra.mxu0 0.0
    %1093 = vmatprep.subr.mxu0 0.0
    %1094 = vmatpush1.msra.mxu0 0.0
    %1095 = vmatprep.subr.mxu0 0.0
    %1096 = vmatpush1.msra.mxu0 0.0
    %1097 = vmatprep.subr.mxu0 0.0
    %1098 = vmatpush1.msra.mxu0 0.0
    %1099 = vmatprep.subr.mxu0 0.0
    %1100 = vmatpush1.msra.mxu0 0.0
    %1101 = vmatprep.subr.mxu0 0.0
    %1102 = vmatpush1.msra.mxu0 0.0
    %1103 = vmatprep.mubr.f32.mxu0 0.0
    %1104 = vmatmul.mubr.f32.gmra.mrb[0].mxu0 %v1037
    %v1105 = vpop.f32.mrb[0].mxu0
    %v1106 = vadd.f32 0.0, %v1105
    %v1107 = vpop.f32.mrb[0].mxu0
    %1108 = vdwg.mxu0
    %v1109 = vsel %vm1036, %v1035, 0
    %1111 = vmatprep.subr.mxu0 0.0
    %1112 = vmatpush1.msra.mxu0 %v1012
    %1113 = vmatprep.subr.mxu0 0.0
    %1114 = vmatpush1.msra.mxu0 0.0
    %1115 = vmatprep.subr.mxu0 0.0
    %1116 = vmatpush1.msra.mxu0 0.0
    %1117 = vmatprep.subr.mxu0 0.0
    %1118 = vmatpush1.msra.mxu0 0.0
    %1119 = vmatprep.subr.mxu0 0.0
    %1120 = vmatpush1.msra.mxu0 0.0
    %1121 = vmatprep.subr.mxu0 0.0
    %1122 = vmatpush1.msra.mxu0 0.0
    %1123 = vmatprep.subr.mxu0 0.0
    %1124 = vmatpush1.msra.mxu0 0.0
    %1125 = vmatprep.subr.mxu0 0.0
    %1126 = vmatpush1.msra.mxu0 0.0
    %1127 = vmatprep.subr.mxu0 0.0
    %1128 = vmatpush1.msra.mxu0 0.0
    %1129 = vmatprep.subr.mxu0 0.0
    %1130 = vmatpush1.msra.mxu0 0.0
    %1131 = vmatprep.subr.mxu0 0.0
    %1132 = vmatpush1.msra.mxu0 0.0
    %1133 = vmatprep.subr.mxu0 0.0
    %1134 = vmatpush1.msra.mxu0 0.0
    %1135 = vmatprep.subr.mxu0 0.0
    %1136 = vmatpush1.msra.mxu0 0.0
    %1137 = vmatprep.subr.mxu0 0.0
    %1138 = vmatpush1.msra.mxu0 0.0
    %1139 = vmatprep.subr.mxu0 0.0
    %1140 = vmatpush1.msra.mxu0 0.0
    %1141 = vmatprep.subr.mxu0 0.0
    %1142 = vmatpush1.msra.mxu0 0.0
    %1143 = vmatprep.subr.mxu0 0.0
    %1144 = vmatpush1.msra.mxu0 0.0
    %1145 = vmatprep.subr.mxu0 0.0
    %1146 = vmatpush1.msra.mxu0 0.0
    %1147 = vmatprep.subr.mxu0 0.0
    %1148 = vmatpush1.msra.mxu0 0.0
    %1149 = vmatprep.subr.mxu0 0.0
    %1150 = vmatpush1.msra.mxu0 0.0
    %1151 = vmatprep.subr.mxu0 0.0
    %1152 = vmatpush1.msra.mxu0 0.0
    %1153 = vmatprep.subr.mxu0 0.0
    %1154 = vmatpush1.msra.mxu0 0.0
    %1155 = vmatprep.subr.mxu0 0.0
    %1156 = vmatpush1.msra.mxu0 0.0
    %1157 = vmatprep.subr.mxu0 0.0
    %1158 = vmatpush1.msra.mxu0 0.0
    %1159 = vmatprep.subr.mxu0 0.0
    %1160 = vmatpush1.msra.mxu0 0.0
    %1161 = vmatprep.subr.mxu0 0.0
    %1162 = vmatpush1.msra.mxu0 0.0
    %1163 = vmatprep.subr.mxu0 0.0
    %1164 = vmatpush1.msra.mxu0 0.0
    %1165 = vmatprep.subr.mxu0 0.0
    %1166 = vmatpush1.msra.mxu0 0.0
    %1167 = vmatprep.subr.mxu0 0.0
    %1168 = vmatpush1.msra.mxu0 0.0
    %1169 = vmatprep.subr.mxu0 0.0
    %1170 = vmatpush1.msra.mxu0 0.0
    %1171 = vmatprep.subr.mxu0 0.0
    %1172 = vmatpush1.msra.mxu0 0.0
    %1173 = vmatprep.subr.mxu0 0.0
    %1174 = vmatpush1.msra.mxu0 0.0
    %1175 = vmatprep.mubr.f32.mxu0 0.0
    %1176 = vmatmul.mubr.f32.gmra.mrb[0].mxu0 %v1109
    %v1177 = vpop.f32.mrb[0].mxu0
    %v1178 = vadd.f32 0.0, %v1177
    %v1179 = vpop.f32.mrb[0].mxu0
    %1180 = vdwg.mxu0
    %v1183 = vrot.slane %v1178, 7
    %v1184 = vsel %vm499, %v1183, %v1106
    %v1186 = vadd.f32 %v975, %v1184
    %v1187 = vadd.f32 %v1186, 1e-06
    %v1188 = vlog2.pop %v1187
    %v1189 = vmul.f32 %v1188, 0.6931472
    %1190 = vst [vmem:[#allocation15] sm:$0x3] %v1189
    %v1192 = vadd.s32 %v490, 4294967264
    %v1193 = vlaneseq
    %v1194 = vshrl.u32 %v1193, 7
    %v1195 = vsub.s32 %v1192, %v1194
    %v1196 = vrot.slane %v561, %v1195
    %v1197 = vlaneseq
    %v1198 = vshrl.u32 %v1197, 7
    %v1199 = vsub.s32 %v1192, %v1198
    %v1200 = vrot.slane %v566, %v1199
    %v1201 = vsel %vm499, %v1200, %v1196
    %1203 = vrot.lane.b32.xlu0 %v954, 41
    %v1204 = vpop.permute.xlu0 %1203
    %v1206 = vsel %vm144, %v337, %v1201
    %vm1207 = vcmask 326656
    %v1208 = vsel %vm1207, %v1206, %v1204
    %vm1209 = vcmask 334848
    %v1210 = vsel %vm1209, %v1208, 0.0
    %1211 = vst [vmem:[%s14] sm:$0x3] %v1210
    // Predicated region
    $region82: #{decoder_step.1} parent=1 // pred_check
      _
    $region83: #{decoder_step.1} parent=1 // pred_check_branch
      %1213 = sbr.rel (0) target = $region85
    $region84: #{decoder_step.1} parent=1 // pred_region
      %s1215 = ssub.s32 32, 32
      %1216 = vsyncadd [#allocation4], %s1215
      %s1218 = sshll.u32 [#allocation15], 4
      %s1219 = int_to_ptr.vmem [resolvable:$true] %s1218
      %1221 = dma.vmem_to_hbm [thread:$0]  %s1219, 32, %s13, [#allocation4]
    $region85: #{decoder_step.1} parent=1 // pred_fallthru
      _
    // Predicated region
    $region86: #{decoder_step.1} parent=1 // pred_check
      _
    $region87: #{decoder_step.1} parent=1 // pred_check_branch
      %1223 = sbr.rel (0) target = $region89
    $region88: #{decoder_step.1} parent=1 // pred_region
      _
    $region89: #{decoder_step.1} parent=1 // pred_fallthru
      _
    // Predicated region
    $region90: #{decoder_step.1} parent=1 // pred_check
      _
    $region91: #{decoder_step.1} parent=1 // pred_check_branch
      %1225 = sbr.rel (0) target = $region93
    $region92: #{decoder_step.1} parent=1 // pred_region
      %1226 = dma.done [#allocation4], 32
    $region93: #{decoder_step.1} parent=1 // pred_fallthru
      _
    // Predicated region
    $region94: #{decoder_step.1} parent=1 // pred_check
      _
    $region95: #{decoder_step.1} parent=1 // pred_check_branch
      %1228 = sbr.rel (0) target = $region97
    $region96: #{decoder_step.1} parent=1 // pred_region
      _
    $region97: #{decoder_step.1} parent=1 // pred_fallthru
      _
    %1229 = vsyncpa [#allocation3], 1
    %1230 = vsyncpa [#allocation7], 1
    %1231 = vsyncpa [#allocation10], 1
    %1232 = vsyncpa [#allocation13], 1
    %1233 = vsyncpa [#allocation4], 1
    %1234 = vsyncpa [#allocation5], 1

</llo_original>
